<compile_context>
chip_gen: v6e
topology: v6e:2x2x1
jax: 0.10.0
libtpu: 0.0.40
codegen_flags: <defaults>
</compile_context>

<pallas_src>
import functools

import jax
import jax.numpy as jnp
from jax.experimental import pallas as pl
from jax.experimental.pallas import tpu as pltpu

DB_K = 50.0          # DBHead(k=50)
BN_EPS = 1e-5


def _sigmoid(x):
    # exp goes to the EUP slot; exact reciprocal keeps outputs strictly in (0,1).
    return 1.0 / (1.0 + jnp.exp(-x))


def head_kernel(xcol_ref, w1_ref, g1_ref, b1_ref, w2_ref, cb1_ref,
                g2_ref, b2_ref, w3_ref, cb2_ref, out_ref, *, cm):
    """One Head (Conv3x3+BN+ReLU -> ConvT+BN+ReLU -> ConvT->1 + Sigmoid).

    All activations are (rows, P) with P = N*H*W on the lane axis.
    out_ref: (16, P) = the 16 final 4x4 sub-pixel planes of this head.
    """
    x = xcol_ref[...]                                               # (9*Cin, P)

    # ---- Conv2d(Cin -> Cm, k=3, pad=1, bias=False): one MXU matmul ----------
    c1 = jnp.dot(w1_ref[...], x, preferred_element_type=jnp.float32)  # (Cm, P)

    # ---- BatchNorm2d(Cm), training batch stats (two-pass) + ReLU ------------
    mu1 = jnp.mean(c1, axis=-1, keepdims=True)                      # (Cm, 1)
    d1 = c1 - mu1
    var1 = jnp.mean(d1 * d1, axis=-1, keepdims=True)
    r1 = jnp.maximum(
        d1 * (jax.lax.rsqrt(var1 + BN_EPS) * g1_ref[...]) + b1_ref[...], 0.0)

    # ---- ConvTranspose2d(Cm -> Cm, k=2, s=2): (4*Cm, Cm) @ (Cm, P) ----------
    # row = (di*2+dj)*Cm + co  (sub-pixel plane major, out-channel minor)
    y2 = jnp.dot(w2_ref[...], r1, preferred_element_type=jnp.float32)
    y2 = y2 + cb1_ref[...]                                          # (4*Cm, P)

    # ---- BatchNorm2d(Cm) over the full (N, 2H, 2W) channel + ReLU -----------
    mu_r = jnp.mean(y2, axis=-1, keepdims=True)                     # (4*Cm, 1)
    mu_c = (mu_r[0:cm] + mu_r[cm:2 * cm]
            + mu_r[2 * cm:3 * cm] + mu_r[3 * cm:4 * cm]) * 0.25     # (Cm, 1)
    mu2 = jnp.concatenate([mu_c, mu_c, mu_c, mu_c], axis=0)         # (4*Cm, 1)
    d2 = y2 - mu2
    v_r = jnp.mean(d2 * d2, axis=-1, keepdims=True)
    v_c = (v_r[0:cm] + v_r[cm:2 * cm]
           + v_r[2 * cm:3 * cm] + v_r[3 * cm:4 * cm]) * 0.25
    inv_c = jax.lax.rsqrt(v_c + BN_EPS)
    inv2 = jnp.concatenate([inv_c, inv_c, inv_c, inv_c], axis=0)    # (4*Cm, 1)
    r2 = jnp.maximum(d2 * (inv2 * g2_ref[...]) + b2_ref[...], 0.0)  # (4*Cm, P)

    # ---- ConvTranspose2d(Cm -> 1, k=2, s=2) + Sigmoid: (16, 4*Cm) @ (4*Cm,P)
    logits = jnp.dot(w3_ref[...], r2, preferred_element_type=jnp.float32)
    out_ref[...] = _sigmoid(logits + cb2_ref[...])                  # (16, P)


def combine_kernel(heads_ref, out_ref):
    """DB step function + channel concat, lane-dense."""
    s = heads_ref[0, :, :]                                          # shrink (16,P)
    t = heads_ref[1, :, :]                                          # thresh (16,P)
    out_ref[0, :, :] = s
    out_ref[1, :, :] = t
    out_ref[2, :, :] = _sigmoid(DB_K * (s - t))                     # binary


def dbhead_forward(x_nchw, params):
    """x_nchw: (N, Cin, H, W) float32 (PyTorch NCHW). Returns (N, 3, 4H, 4W)."""
    N, Cin, H, W = x_nchw.shape
    Cm = Cin // 4
    P = N * H * W
    (w1, g1, b1, w2, cb1, g2, b2, w3, cb2) = params

    # glue: im2col -> (9*Cin, P), row = (kh*3+kw)*Cin + ci, lane p = n*H*W+h*W+w
    xpad = jnp.pad(x_nchw.astype(jnp.float32), ((0, 0), (0, 0), (1, 1), (1, 1)))
    cols = [jnp.transpose(xpad[:, :, kh:kh + H, kw:kw + W],
                          (1, 0, 2, 3)).reshape(Cin, P)
            for kh in range(3) for kw in range(3)]
    xcol = jnp.concatenate(cols, axis=0)                            # (9*Cin, P)

    mac = P * (Cm * 9 * Cin + 4 * Cm * Cm + 16 * 4 * Cm)
    ce = pl.CostEstimate(
        flops=int(2 * 2 * mac),                     # 2 heads, 2 flops / MAC
        transcendentals=int(2 * 16 * P),            # per-head output sigmoids
        bytes_accessed=int(4 * (9 * Cin * P + 2 * 16 * P
                                + w1.size + w2.size + w3.size)))

    heads = pl.pallas_call(
        functools.partial(head_kernel, cm=Cm),
        out_shape=jax.ShapeDtypeStruct((2, 16, P), jnp.float32),
        grid=(2,),
        in_specs=[
            pl.BlockSpec((9 * Cin, P), lambda h: (0, 0)),           # xcol (shared)
            pl.BlockSpec((None, Cm, 9 * Cin), lambda h: (h, 0, 0)),  # W1
            pl.BlockSpec((None, Cm, 1), lambda h: (h, 0, 0)),        # BN1 gamma
            pl.BlockSpec((None, Cm, 1), lambda h: (h, 0, 0)),        # BN1 beta
            pl.BlockSpec((None, 4 * Cm, Cm), lambda h: (h, 0, 0)),   # W2 (ConvT1)
            pl.BlockSpec((None, 4 * Cm, 1), lambda h: (h, 0, 0)),    # ConvT1 bias
            pl.BlockSpec((None, 4 * Cm, 1), lambda h: (h, 0, 0)),    # BN2 gamma
            pl.BlockSpec((None, 4 * Cm, 1), lambda h: (h, 0, 0)),    # BN2 beta
            pl.BlockSpec((None, 16, 4 * Cm), lambda h: (h, 0, 0)),   # W3 (ConvT2)
            pl.BlockSpec((None, 16, 1), lambda h: (h, 0, 0)),        # ConvT2 bias
        ],
        out_specs=pl.BlockSpec((None, 16, P), lambda h: (h, 0, 0)),
        compiler_params=pltpu.CompilerParams(
            dimension_semantics=("parallel",)),
        cost_estimate=ce,
    )(xcol, w1, g1, b1, w2, cb1, g2, b2, w3, cb2)

    y3 = pl.pallas_call(
        combine_kernel,
        out_shape=jax.ShapeDtypeStruct((3, 16, P), jnp.float32),
        in_specs=[pl.BlockSpec(memory_space=pltpu.MemorySpace.VMEM)],
        out_specs=pl.BlockSpec(memory_space=pltpu.MemorySpace.VMEM),
    )(heads)

    # glue: depth-to-space (3, 16, P) -> (N, 3, 4H, 4W); row r = DI*4 + DJ.
    y = y3.reshape(3, 4, 4, N, H, W)
    y = jnp.transpose(y, (3, 0, 4, 1, 5, 2)).reshape(N, 3, 4 * H, 4 * W)
    return y
    # TODO(synk): for production DBNet feature maps, add a spatial grid with a
    # 1-row halo and a two-pass (carried) BN reduction so tiles pipeline
    # HBM<->VMEM; tile sizes must be chosen per VMEM budget (v7x 64 MiB).


def init_head_params(key, cin):
    """Deterministic synthetic parameters with the same shapes as Head.__init__."""
    cm = cin // 4
    ks = jax.random.split(key, 9)
    return dict(
        w1=0.2 * jax.random.normal(ks[0], (cm, cin, 3, 3), jnp.float32),   # Conv2d
        g1=1.0 + 0.1 * jax.random.normal(ks[1], (cm,), jnp.float32),       # BN1 gamma
        b1=0.1 * jax.random.normal(ks[2], (cm,), jnp.float32),             # BN1 beta
        w2=0.2 * jax.random.normal(ks[3], (cm, cm, 2, 2), jnp.float32),    # ConvT1 (in,out,kh,kw)
        wb2=0.1 * jax.random.normal(ks[4], (cm,), jnp.float32),            # ConvT1 bias
        g2=1.0 + 0.1 * jax.random.normal(ks[5], (cm,), jnp.float32),       # BN2 gamma
        b2=0.1 * jax.random.normal(ks[6], (cm,), jnp.float32),             # BN2 beta
        w3=0.2 * jax.random.normal(ks[7], (cm, 1, 2, 2), jnp.float32),     # ConvT2
        wb3=0.1 * jax.random.normal(ks[8], (1,), jnp.float32),             # ConvT2 bias
    )


def pack_params(p_bin, p_thr, cin):
    """Reformat PyTorch-shaped weights into the matmul matrices the kernel uses."""
    cm = cin // 4

    def pack_one(p):
        # Conv3x3: (Cm, Cin, 3, 3) -> (Cm, 9*Cin), column = (kh*3+kw)*Cin + ci
        w1m = jnp.transpose(p['w1'], (0, 2, 3, 1)).reshape(cm, 9 * cin)
        # ConvT1: (Cm_in, Cm_out, 2, 2) -> (4*Cm, Cm), row = (di*2+dj)*Cm + co
        w2m = jnp.transpose(p['w2'], (2, 3, 1, 0)).reshape(4 * cm, cm)
        cb1 = jnp.tile(p['wb2'], 4).reshape(4 * cm, 1)
        g2r = jnp.tile(p['g2'], 4).reshape(4 * cm, 1)
        b2r = jnp.tile(p['b2'], 4).reshape(4 * cm, 1)
        # ConvT2: (Cm, 1, 2, 2) -> (16, 4*Cm); final sub-pixel (DI,DJ) row DI*4+DJ
        w3m = jnp.zeros((16, 4 * cm), jnp.float32)
        for DI in range(4):
            for DJ in range(4):
                di1, di2 = DI // 2, DI % 2
                dj1, dj2 = DJ // 2, DJ % 2
                sub1 = di1 * 2 + dj1
                w3m = w3m.at[DI * 4 + DJ, sub1 * cm:(sub1 + 1) * cm].set(
                    p['w3'][:, 0, di2, dj2])
        cb2 = jnp.full((16, 1), p['wb3'][0], jnp.float32)
        g1c = p['g1'].reshape(cm, 1)
        b1c = p['b1'].reshape(cm, 1)
        return (w1m, g1c, b1c, w2m, cb1, g2r, b2r, w3m, cb2)

    pb, pt = pack_one(p_bin), pack_one(p_thr)
    # Stack the two heads on a leading axis for the grid=(2,) head axis.
    return tuple(jnp.stack([pb[i], pt[i]], axis=0) for i in range(9))


if __name__ == "__main__":
    key = jax.random.PRNGKey(0)
    kx, kb, kt = jax.random.split(key, 3)

    N, Cin, H, W = 2, 16, 16, 16           # in_channels=16 -> mid channels = 4
    x = jax.random.normal(kx, (N, Cin, H, W), jnp.float32)

    p_bin = init_head_params(kb, Cin)      # self.binarize
    p_thr = init_head_params(kt, Cin)      # self.thresh
    params = pack_params(p_bin, p_thr, Cin)

    fwd = jax.jit(dbhead_forward)
    y = jax.block_until_ready(fwd(x, params))

    assert y.shape == (N, 3, 4 * H, 4 * W), y.shape
    assert bool(jnp.all(jnp.isfinite(y)))
    assert bool(jnp.all((y >= 0.0) & (y <= 1.0)))   # sigmoid / step outputs
    print("KERNEL_OK")
</pallas_src>

<mosaic_0001>
module attributes {stable_mosaic.version = 11 : i64} {
  func.func @combine_kernel(%arg0: memref<2x16x512xf32, #tpu.memory_space<vmem>>, %arg1: memref<3x16x512xf32, #tpu.memory_space<vmem>>) attributes {dimension_semantics = [], scalar_prefetch = 0 : i64, scratch_operands = 0 : i64, tpu.core_type = #tpu.core_type<tc>} {
    %c0 = arith.constant 0 : index
    %c0_0 = arith.constant 0 : index
    %c0_1 = arith.constant 0 : index
    %0 = vector.load %arg0[%c0, %c0_0, %c0_1] : memref<2x16x512xf32, #tpu.memory_space<vmem>>, vector<1x16x512xf32>
    %1 = vector.shape_cast %0 : vector<1x16x512xf32> to vector<16x512xf32>
    %c1 = arith.constant 1 : index
    %c0_2 = arith.constant 0 : index
    %c0_3 = arith.constant 0 : index
    %2 = vector.load %arg0[%c1, %c0_2, %c0_3] : memref<2x16x512xf32, #tpu.memory_space<vmem>>, vector<1x16x512xf32>
    %3 = vector.shape_cast %2 : vector<1x16x512xf32> to vector<16x512xf32>
    %c0_4 = arith.constant 0 : index
    %c0_5 = arith.constant 0 : index
    %c0_6 = arith.constant 0 : index
    %4 = vector.load %arg1[%c0_4, %c0_5, %c0_6] : memref<3x16x512xf32, #tpu.memory_space<vmem>>, vector<1x16x512xf32>
    %5 = vector.shape_cast %4 : vector<1x16x512xf32> to vector<16x512xf32>
    %6 = vector.shape_cast %1 : vector<16x512xf32> to vector<1x16x512xf32>
    tpu.vector_store %arg1[%c0_4, %c0_5, %c0_6], %6 {strides = array<i32>} : memref<3x16x512xf32, #tpu.memory_space<vmem>>, vector<1x16x512xf32>,
    %c1_7 = arith.constant 1 : index
    %c0_8 = arith.constant 0 : index
    %c0_9 = arith.constant 0 : index
    %7 = vector.load %arg1[%c1_7, %c0_8, %c0_9] : memref<3x16x512xf32, #tpu.memory_space<vmem>>, vector<1x16x512xf32>
    %8 = vector.shape_cast %7 : vector<1x16x512xf32> to vector<16x512xf32>
    %9 = vector.shape_cast %3 : vector<16x512xf32> to vector<1x16x512xf32>
    tpu.vector_store %arg1[%c1_7, %c0_8, %c0_9], %9 {strides = array<i32>} : memref<3x16x512xf32, #tpu.memory_space<vmem>>, vector<1x16x512xf32>,
    %10 = arith.subf %1, %3 : vector<16x512xf32>
    %cst = arith.constant 5.000000e+01 : f32
    %11 = vector.broadcast %cst : f32 to vector<16x512xf32>
    %12 = arith.mulf %11, %10 : vector<16x512xf32>
    %cst_10 = arith.constant 0.000000e+00 : f32
    %13 = vector.broadcast %cst_10 : f32 to vector<16x512xf32>
    %14 = arith.subf %13, %12 : vector<16x512xf32>
    %15 = math.exp %14 : vector<16x512xf32>
    %cst_11 = arith.constant 1.000000e+00 : f32
    %16 = vector.broadcast %cst_11 : f32 to vector<16x512xf32>
    %17 = arith.addf %16, %15 : vector<16x512xf32>
    %cst_12 = arith.constant 1.000000e+00 : f32
    %18 = vector.broadcast %cst_12 : f32 to vector<16x512xf32>
    %19 = arith.divf %18, %17 : vector<16x512xf32>
    %c2 = arith.constant 2 : index
    %c0_13 = arith.constant 0 : index
    %c0_14 = arith.constant 0 : index
    %20 = vector.load %arg1[%c2, %c0_13, %c0_14] : memref<3x16x512xf32, #tpu.memory_space<vmem>>, vector<1x16x512xf32>
    %21 = vector.shape_cast %20 : vector<1x16x512xf32> to vector<16x512xf32>
    %22 = vector.shape_cast %19 : vector<16x512xf32> to vector<1x16x512xf32>
    tpu.vector_store %arg1[%c2, %c0_13, %c0_14], %22 {strides = array<i32>} : memref<3x16x512xf32, #tpu.memory_space<vmem>>, vector<1x16x512xf32>,
    return
  }
}

module attributes {stable_mosaic.version = 11 : i64} {
  func.func @head_kernel(%arg0: i32, %arg1: memref<144x512xf32, #tpu.memory_space<vmem>>, %arg2: memref<1x4x144xf32, #tpu.memory_space<vmem>>, %arg3: memref<1x4x1xf32, #tpu.memory_space<vmem>>, %arg4: memref<1x4x1xf32, #tpu.memory_space<vmem>>, %arg5: memref<1x16x4xf32, #tpu.memory_space<vmem>>, %arg6: memref<1x16x1xf32, #tpu.memory_space<vmem>>, %arg7: memref<1x16x1xf32, #tpu.memory_space<vmem>>, %arg8: memref<1x16x1xf32, #tpu.memory_space<vmem>>, %arg9: memref<1x16x16xf32, #tpu.memory_space<vmem>>, %arg10: memref<1x16x1xf32, #tpu.memory_space<vmem>>, %arg11: memref<1x16x512xf32, #tpu.memory_space<vmem>>) attributes {dimension_semantics = [#tpu.dimension_semantics<parallel>], iteration_bounds = array<i64: 2>, scalar_prefetch = 0 : i64, scratch_operands = 0 : i64, tpu.core_type = #tpu.core_type<tc>, window_params = [{pipeline_mode = #tpu.pipeline_mode<synchronous>, transform_indices = @transform_0, window_bounds = array<i64: 144, 512>}, {transform_indices = @transform_1, window_bounds = array<i64: 1, 4, 144>}, {transform_indices = @transform_2, window_bounds = array<i64: 1, 4, 1>}, {transform_indices = @transform_3, window_bounds = array<i64: 1, 4, 1>}, {transform_indices = @transform_4, window_bounds = array<i64: 1, 16, 4>}, {transform_indices = @transform_5, window_bounds = array<i64: 1, 16, 1>}, {transform_indices = @transform_6, window_bounds = array<i64: 1, 16, 1>}, {transform_indices = @transform_7, window_bounds = array<i64: 1, 16, 1>}, {transform_indices = @transform_8, window_bounds = array<i64: 1, 16, 16>}, {transform_indices = @transform_9, window_bounds = array<i64: 1, 16, 1>}, {transform_indices = @transform_10, window_bounds = array<i64: 1, 16, 512>}]} {
    %c0 = arith.constant 0 : index
    %c0_0 = arith.constant 0 : index
    %0 = vector.load %arg1[%c0, %c0_0] : memref<144x512xf32, #tpu.memory_space<vmem>>, vector<144x512xf32>
    %c0_1 = arith.constant 0 : index
    %c0_2 = arith.constant 0 : index
    %c0_3 = arith.constant 0 : index
    %1 = vector.load %arg2[%c0_1, %c0_2, %c0_3] : memref<1x4x144xf32, #tpu.memory_space<vmem>>, vector<1x4x144xf32>
    %2 = vector.shape_cast %1 : vector<1x4x144xf32> to vector<4x144xf32>
    %cst = arith.constant dense<0.000000e+00> : vector<4x512xf32>
    %3 = tpu.matmul %2, %0, %cst {dimension_numbers = #tpu.dot_dimension_numbers<[1], [0], [0], [1], [0, 0, 1, 1], [], []>} : vector<4x144xf32>, vector<144x512xf32>, vector<4x512xf32> -> vector<4x512xf32>
    %cst_4 = arith.constant dense<0.000000e+00> : vector<4xf32>
    %4 = vector.multi_reduction <add>, %3, %cst_4 [1] : vector<4x512xf32> to vector<4xf32>
    %5 = vector.shape_cast %4 : vector<4xf32> to vector<4x1xf32>
    %cst_5 = arith.constant 5.120000e+02 : f32
    %6 = vector.broadcast %cst_5 : f32 to vector<4x1xf32>
    %7 = arith.divf %5, %6 : vector<4x1xf32>
    %8 = vector.broadcast %7 : vector<4x1xf32> to vector<4x512xf32>
    %9 = arith.subf %3, %8 : vector<4x512xf32>
    %10 = arith.mulf %9, %9 : vector<4x512xf32>
    %cst_6 = arith.constant dense<0.000000e+00> : vector<4xf32>
    %11 = vector.multi_reduction <add>, %10, %cst_6 [1] : vector<4x512xf32> to vector<4xf32>
    %12 = vector.shape_cast %11 : vector<4xf32> to vector<4x1xf32>
    %cst_7 = arith.constant 5.120000e+02 : f32
    %13 = vector.broadcast %cst_7 : f32 to vector<4x1xf32>
    %14 = arith.divf %12, %13 : vector<4x1xf32>
    %cst_8 = arith.constant 9.99999974E-6 : f32
    %15 = vector.broadcast %cst_8 : f32 to vector<4x1xf32>
    %16 = arith.addf %14, %15 : vector<4x1xf32>
    %17 = math.rsqrt %16 : vector<4x1xf32>
    %c0_9 = arith.constant 0 : index
    %c0_10 = arith.constant 0 : index
    %c0_11 = arith.constant 0 : index
    %18 = vector.load %arg3[%c0_9, %c0_10, %c0_11] : memref<1x4x1xf32, #tpu.memory_space<vmem>>, vector<1x4x1xf32>
    %19 = vector.shape_cast %18 : vector<1x4x1xf32> to vector<4x1xf32>
    %20 = arith.mulf %17, %19 : vector<4x1xf32>
    %21 = vector.broadcast %20 : vector<4x1xf32> to vector<4x512xf32>
    %22 = arith.mulf %9, %21 : vector<4x512xf32>
    %c0_12 = arith.constant 0 : index
    %c0_13 = arith.constant 0 : index
    %c0_14 = arith.constant 0 : index
    %23 = vector.load %arg4[%c0_12, %c0_13, %c0_14] : memref<1x4x1xf32, #tpu.memory_space<vmem>>, vector<1x4x1xf32>
    %24 = vector.shape_cast %23 : vector<1x4x1xf32> to vector<4x1xf32>
    %25 = vector.broadcast %24 : vector<4x1xf32> to vector<4x512xf32>
    %26 = arith.addf %22, %25 : vector<4x512xf32>
    %cst_15 = arith.constant 0.000000e+00 : f32
    %27 = vector.broadcast %cst_15 : f32 to vector<4x512xf32>
    %28 = arith.maximumf %26, %27 : vector<4x512xf32>
    %c0_16 = arith.constant 0 : index
    %c0_17 = arith.constant 0 : index
    %c0_18 = arith.constant 0 : index
    %29 = vector.load %arg5[%c0_16, %c0_17, %c0_18] : memref<1x16x4xf32, #tpu.memory_space<vmem>>, vector<1x16x4xf32>
    %30 = vector.shape_cast %29 : vector<1x16x4xf32> to vector<16x4xf32>
    %cst_19 = arith.constant dense<0.000000e+00> : vector<16x512xf32>
    %31 = tpu.matmul %30, %28, %cst_19 {dimension_numbers = #tpu.dot_dimension_numbers<[1], [0], [0], [1], [0, 0, 1, 1], [], []>} : vector<16x4xf32>, vector<4x512xf32>, vector<16x512xf32> -> vector<16x512xf32>
    %c0_20 = arith.constant 0 : index
    %c0_21 = arith.constant 0 : index
    %c0_22 = arith.constant 0 : index
    %32 = vector.load %arg6[%c0_20, %c0_21, %c0_22] : memref<1x16x1xf32, #tpu.memory_space<vmem>>, vector<1x16x1xf32>
    %33 = vector.shape_cast %32 : vector<1x16x1xf32> to vector<16x1xf32>
    %34 = vector.broadcast %33 : vector<16x1xf32> to vector<16x512xf32>
    %35 = arith.addf %31, %34 : vector<16x512xf32>
    %cst_23 = arith.constant dense<0.000000e+00> : vector<16xf32>
    %36 = vector.multi_reduction <add>, %35, %cst_23 [1] : vector<16x512xf32> to vector<16xf32>
    %37 = vector.shape_cast %36 : vector<16xf32> to vector<16x1xf32>
    %cst_24 = arith.constant 5.120000e+02 : f32
    %38 = vector.broadcast %cst_24 : f32 to vector<16x1xf32>
    %39 = arith.divf %37, %38 : vector<16x1xf32>
    %40 = vector.extract_strided_slice %39 {offsets = [0, 0], sizes = [4, 1], strides = [1, 1]} : vector<16x1xf32> to vector<4x1xf32>
    %41 = vector.extract_strided_slice %39 {offsets = [4, 0], sizes = [4, 1], strides = [1, 1]} : vector<16x1xf32> to vector<4x1xf32>
    %42 = arith.addf %40, %41 : vector<4x1xf32>
    %43 = vector.extract_strided_slice %39 {offsets = [8, 0], sizes = [4, 1], strides = [1, 1]} : vector<16x1xf32> to vector<4x1xf32>
    %44 = arith.addf %42, %43 : vector<4x1xf32>
    %45 = vector.extract_strided_slice %39 {offsets = [12, 0], sizes = [4, 1], strides = [1, 1]} : vector<16x1xf32> to vector<4x1xf32>
    %46 = arith.addf %44, %45 : vector<4x1xf32>
    %cst_25 = arith.constant 2.500000e-01 : f32
    %47 = vector.broadcast %cst_25 : f32 to vector<4x1xf32>
    %48 = arith.mulf %46, %47 : vector<4x1xf32>
    %49 = tpu.concatenate %48, %48, %48, %48 in 0 : vector<4x1xf32>, vector<4x1xf32>, vector<4x1xf32>, vector<4x1xf32> -> vector<16x1xf32>
    %50 = vector.broadcast %49 : vector<16x1xf32> to vector<16x512xf32>
    %51 = arith.subf %35, %50 : vector<16x512xf32>
    %52 = arith.mulf %51, %51 : vector<16x512xf32>
    %cst_26 = arith.constant dense<0.000000e+00> : vector<16xf32>
    %53 = vector.multi_reduction <add>, %52, %cst_26 [1] : vector<16x512xf32> to vector<16xf32>
    %54 = vector.shape_cast %53 : vector<16xf32> to vector<16x1xf32>
    %cst_27 = arith.constant 5.120000e+02 : f32
    %55 = vector.broadcast %cst_27 : f32 to vector<16x1xf32>
    %56 = arith.divf %54, %55 : vector<16x1xf32>
    %57 = vector.extract_strided_slice %56 {offsets = [0, 0], sizes = [4, 1], strides = [1, 1]} : vector<16x1xf32> to vector<4x1xf32>
    %58 = vector.extract_strided_slice %56 {offsets = [4, 0], sizes = [4, 1], strides = [1, 1]} : vector<16x1xf32> to vector<4x1xf32>
    %59 = arith.addf %57, %58 : vector<4x1xf32>
    %60 = vector.extract_strided_slice %56 {offsets = [8, 0], sizes = [4, 1], strides = [1, 1]} : vector<16x1xf32> to vector<4x1xf32>
    %61 = arith.addf %59, %60 : vector<4x1xf32>
    %62 = vector.extract_strided_slice %56 {offsets = [12, 0], sizes = [4, 1], strides = [1, 1]} : vector<16x1xf32> to vector<4x1xf32>
    %63 = arith.addf %61, %62 : vector<4x1xf32>
    %cst_28 = arith.constant 2.500000e-01 : f32
    %64 = vector.broadcast %cst_28 : f32 to vector<4x1xf32>
    %65 = arith.mulf %63, %64 : vector<4x1xf32>
    %cst_29 = arith.constant 9.99999974E-6 : f32
    %66 = vector.broadcast %cst_29 : f32 to vector<4x1xf32>
    %67 = arith.addf %65, %66 : vector<4x1xf32>
    %68 = math.rsqrt %67 : vector<4x1xf32>
    %69 = tpu.concatenate %68, %68, %68, %68 in 0 : vector<4x1xf32>, vector<4x1xf32>, vector<4x1xf32>, vector<4x1xf32> -> vector<16x1xf32>
    %c0_30 = arith.constant 0 : index
    %c0_31 = arith.constant 0 : index
    %c0_32 = arith.constant 0 : index
    %70 = vector.load %arg7[%c0_30, %c0_31, %c0_32] : memref<1x16x1xf32, #tpu.memory_space<vmem>>, vector<1x16x1xf32>
    %71 = vector.shape_cast %70 : vector<1x16x1xf32> to vector<16x1xf32>
    %72 = arith.mulf %69, %71 : vector<16x1xf32>
    %73 = vector.broadcast %72 : vector<16x1xf32> to vector<16x512xf32>
    %74 = arith.mulf %51, %73 : vector<16x512xf32>
    %c0_33 = arith.constant 0 : index
    %c0_34 = arith.constant 0 : index
    %c0_35 = arith.constant 0 : index
    %75 = vector.load %arg8[%c0_33, %c0_34, %c0_35] : memref<1x16x1xf32, #tpu.memory_space<vmem>>, vector<1x16x1xf32>
    %76 = vector.shape_cast %75 : vector<1x16x1xf32> to vector<16x1xf32>
    %77 = vector.broadcast %76 : vector<16x1xf32> to vector<16x512xf32>
    %78 = arith.addf %74, %77 : vector<16x512xf32>
    %cst_36 = arith.constant 0.000000e+00 : f32
    %79 = vector.broadcast %cst_36 : f32 to vector<16x512xf32>
    %80 = arith.maximumf %78, %79 : vector<16x512xf32>
    %c0_37 = arith.constant 0 : index
    %c0_38 = arith.constant 0 : index
    %c0_39 = arith.constant 0 : index
    %81 = vector.load %arg9[%c0_37, %c0_38, %c0_39] : memref<1x16x16xf32, #tpu.memory_space<vmem>>, vector<1x16x16xf32>
    %82 = vector.shape_cast %81 : vector<1x16x16xf32> to vector<16x16xf32>
    %cst_40 = arith.constant dense<0.000000e+00> : vector<16x512xf32>
    %83 = tpu.matmul %82, %80, %cst_40 {dimension_numbers = #tpu.dot_dimension_numbers<[1], [0], [0], [1], [0, 0, 1, 1], [], []>} : vector<16x16xf32>, vector<16x512xf32>, vector<16x512xf32> -> vector<16x512xf32>
    %c0_41 = arith.constant 0 : index
    %c0_42 = arith.constant 0 : index
    %c0_43 = arith.constant 0 : index
    %84 = vector.load %arg10[%c0_41, %c0_42, %c0_43] : memref<1x16x1xf32, #tpu.memory_space<vmem>>, vector<1x16x1xf32>
    %85 = vector.shape_cast %84 : vector<1x16x1xf32> to vector<16x1xf32>
    %86 = vector.broadcast %85 : vector<16x1xf32> to vector<16x512xf32>
    %87 = arith.addf %83, %86 : vector<16x512xf32>
    %cst_44 = arith.constant 0.000000e+00 : f32
    %88 = vector.broadcast %cst_44 : f32 to vector<16x512xf32>
    %89 = arith.subf %88, %87 : vector<16x512xf32>
    %90 = math.exp %89 : vector<16x512xf32>
    %cst_45 = arith.constant 1.000000e+00 : f32
    %91 = vector.broadcast %cst_45 : f32 to vector<16x512xf32>
    %92 = arith.addf %91, %90 : vector<16x512xf32>
    %cst_46 = arith.constant 1.000000e+00 : f32
    %93 = vector.broadcast %cst_46 : f32 to vector<16x512xf32>
    %94 = arith.divf %93, %92 : vector<16x512xf32>
    %c0_47 = arith.constant 0 : index
    %c0_48 = arith.constant 0 : index
    %c0_49 = arith.constant 0 : index
    %95 = vector.load %arg11[%c0_47, %c0_48, %c0_49] : memref<1x16x512xf32, #tpu.memory_space<vmem>>, vector<1x16x512xf32>
    %96 = vector.shape_cast %95 : vector<1x16x512xf32> to vector<16x512xf32>
    %97 = vector.shape_cast %94 : vector<16x512xf32> to vector<1x16x512xf32>
    tpu.vector_store %arg11[%c0_47, %c0_48, %c0_49], %97 {strides = array<i32>} : memref<1x16x512xf32, #tpu.memory_space<vmem>>, vector<1x16x512xf32>,
    return
  }
  func.func @transform_0(%arg0: i32) -> (i32, i32) {
    %c0_i32 = arith.constant 0 : i32
    %c0_i32_0 = arith.constant 0 : i32
    %c0_i32_1 = arith.constant 0 : i32
    return %c0_i32, %c0_i32_0 : i32, i32
  }
  func.func @transform_1(%arg0: i32) -> (i32, i32, i32) {
    %c0_i32 = arith.constant 0 : i32
    %c0_i32_0 = arith.constant 0 : i32
    %c0_i32_1 = arith.constant 0 : i32
    return %arg0, %c0_i32, %c0_i32_0 : i32, i32, i32
  }
  func.func @transform_2(%arg0: i32) -> (i32, i32, i32) {
    %c0_i32 = arith.constant 0 : i32
    %c0_i32_0 = arith.constant 0 : i32
    %c0_i32_1 = arith.constant 0 : i32
    return %arg0, %c0_i32, %c0_i32_0 : i32, i32, i32
  }
  func.func @transform_3(%arg0: i32) -> (i32, i32, i32) {
    %c0_i32 = arith.constant 0 : i32
    %c0_i32_0 = arith.constant 0 : i32
    %c0_i32_1 = arith.constant 0 : i32
    return %arg0, %c0_i32, %c0_i32_0 : i32, i32, i32
  }
  func.func @transform_4(%arg0: i32) -> (i32, i32, i32) {
    %c0_i32 = arith.constant 0 : i32
    %c0_i32_0 = arith.constant 0 : i32
    %c0_i32_1 = arith.constant 0 : i32
    return %arg0, %c0_i32, %c0_i32_0 : i32, i32, i32
  }
  func.func @transform_5(%arg0: i32) -> (i32, i32, i32) {
    %c0_i32 = arith.constant 0 : i32
    %c0_i32_0 = arith.constant 0 : i32
    %c0_i32_1 = arith.constant 0 : i32
    return %arg0, %c0_i32, %c0_i32_0 : i32, i32, i32
  }
  func.func @transform_6(%arg0: i32) -> (i32, i32, i32) {
    %c0_i32 = arith.constant 0 : i32
    %c0_i32_0 = arith.constant 0 : i32
    %c0_i32_1 = arith.constant 0 : i32
    return %arg0, %c0_i32, %c0_i32_0 : i32, i32, i32
  }
  func.func @transform_7(%arg0: i32) -> (i32, i32, i32) {
    %c0_i32 = arith.constant 0 : i32
    %c0_i32_0 = arith.constant 0 : i32
    %c0_i32_1 = arith.constant 0 : i32
    return %arg0, %c0_i32, %c0_i32_0 : i32, i32, i32
  }
  func.func @transform_8(%arg0: i32) -> (i32, i32, i32) {
    %c0_i32 = arith.constant 0 : i32
    %c0_i32_0 = arith.constant 0 : i32
    %c0_i32_1 = arith.constant 0 : i32
    return %arg0, %c0_i32, %c0_i32_0 : i32, i32, i32
  }
  func.func @transform_9(%arg0: i32) -> (i32, i32, i32) {
    %c0_i32 = arith.constant 0 : i32
    %c0_i32_0 = arith.constant 0 : i32
    %c0_i32_1 = arith.constant 0 : i32
    return %arg0, %c0_i32, %c0_i32_0 : i32, i32, i32
  }
  func.func @transform_10(%arg0: i32) -> (i32, i32, i32) {
    %c0_i32 = arith.constant 0 : i32
    %c0_i32_0 = arith.constant 0 : i32
    %c0_i32_1 = arith.constant 0 : i32
    return %arg0, %c0_i32, %c0_i32_0 : i32, i32, i32
  }
}

</mosaic_0001>

<llo_original>
// kernel: dbhead_forward.3
$region0: #{dbhead_forward.3}
  #allocation0 [shape = 'u32[]', space=smem, size = 0x4, offset = 0x4, fixed_abs, tag = 'smem constant byte address 0x4 - core index']
  #allocation1 [shape = 'u32[144,128]{1,0:T(1,128)}', space=vmem, size = 0x12000, scoped, tag = 'internal scratch']
  %s0 = inlined_call_operand.vmem [shape: f32[2,16,512], index: 0, kind: input, shape index: {}]
  %s1 = inlined_call_operand.vmem [shape: f32[3,16,512], index: 1, kind: output, shape index: {}]
  %s2 = sld [smem:[#allocation0]]
  $region14: #{dbhead_forward.3} parent=0
    _
  %s4 = ssub.s32 1, %s2
  %s5 = scalar_select 0, %s4, %s2
  // Predicated region
  $region2: #{dbhead_forward.3} parent=0 // pred_check
    _
  $region3: #{dbhead_forward.3} parent=0 // pred_check_branch
    %7 = sbr.rel (0) target = $region5
  $region4: #{dbhead_forward.3} parent=0 // pred_region
    _
  $region5: #{dbhead_forward.3} parent=0 // pred_fallthru
    _
  %v8 = vld [vmem:[%s0] sm:$0xff]
  %v9 = vld [vmem:[%s0 + $0x8] sm:$0xff]
  %v10 = vld [vmem:[%s0 + $0x10] sm:$0xff]
  %v11 = vld [vmem:[%s0 + $0x18] sm:$0xff]
  %v12 = vld [vmem:[%s0 + $0x20] sm:$0xff]
  %v13 = vld [vmem:[%s0 + $0x28] sm:$0xff]
  %v14 = vld [vmem:[%s0 + $0x30] sm:$0xff]
  %v15 = vld [vmem:[%s0 + $0x38] sm:$0xff]
  %s16 = scalar_lea.vmem %s0, 64
  %v17 = vld [vmem:[%s16] sm:$0xff]
  %v18 = vld [vmem:[%s16 + $0x8] sm:$0xff]
  %v19 = vld [vmem:[%s16 + $0x10] sm:$0xff]
  %v20 = vld [vmem:[%s16 + $0x18] sm:$0xff]
  %v21 = vld [vmem:[%s16 + $0x20] sm:$0xff]
  %v22 = vld [vmem:[%s16 + $0x28] sm:$0xff]
  %v23 = vld [vmem:[%s16 + $0x30] sm:$0xff]
  %v24 = vld [vmem:[%s16 + $0x38] sm:$0xff]
  %25 = vst [vmem:[%s1] sm:$0xff] %v8
  %26 = vst [vmem:[%s1 + $0x8] sm:$0xff] %v9
  %27 = vst [vmem:[%s1 + $0x10] sm:$0xff] %v10
  %28 = vst [vmem:[%s1 + $0x18] sm:$0xff] %v11
  %29 = vst [vmem:[%s1 + $0x20] sm:$0xff] %v12
  %30 = vst [vmem:[%s1 + $0x28] sm:$0xff] %v13
  %31 = vst [vmem:[%s1 + $0x30] sm:$0xff] %v14
  %32 = vst [vmem:[%s1 + $0x38] sm:$0xff] %v15
  %s33 = scalar_lea.vmem %s1, 64
  %34 = vst [vmem:[%s33] sm:$0xff] %v17
  %35 = vst [vmem:[%s33 + $0x8] sm:$0xff] %v18
  %36 = vst [vmem:[%s33 + $0x10] sm:$0xff] %v19
  %37 = vst [vmem:[%s33 + $0x18] sm:$0xff] %v20
  %38 = vst [vmem:[%s33 + $0x20] sm:$0xff] %v21
  %39 = vst [vmem:[%s33 + $0x28] sm:$0xff] %v22
  %40 = vst [vmem:[%s33 + $0x30] sm:$0xff] %v23
  %41 = vst [vmem:[%s33 + $0x38] sm:$0xff] %v24
  %v42 = vsub.f32 %v8, %v17
  %v43 = vsub.f32 %v9, %v18
  %v44 = vsub.f32 %v10, %v19
  %v45 = vsub.f32 %v11, %v20
  %v46 = vsub.f32 %v12, %v21
  %v47 = vsub.f32 %v13, %v22
  %v48 = vsub.f32 %v14, %v23
  %v49 = vsub.f32 %v15, %v24
  %v50 = vmul.f32 %v42, 50.0
  %v51 = vmul.f32 %v43, 50.0
  %v52 = vmul.f32 %v44, 50.0
  %v53 = vmul.f32 %v45, 50.0
  %v54 = vmul.f32 %v46, 50.0
  %v55 = vmul.f32 %v47, 50.0
  %v56 = vmul.f32 %v48, 50.0
  %v57 = vmul.f32 %v49, 50.0
  %v58 = vsub.f32 0.0, %v50
  %v59 = vsub.f32 0.0, %v51
  %v60 = vsub.f32 0.0, %v52
  %v61 = vsub.f32 0.0, %v53
  %v62 = vsub.f32 0.0, %v54
  %v63 = vsub.f32 0.0, %v55
  %v64 = vsub.f32 0.0, %v56
  %v65 = vsub.f32 0.0, %v57
  %v66 = vmul.f32 %v58, 1.442695
  %v67 = vpow.pop %v66
  %v68 = vmul.f32 %v59, 1.442695
  %v69 = vpow.pop %v68
  %v70 = vmul.f32 %v60, 1.442695
  %v71 = vpow.pop %v70
  %v72 = vmul.f32 %v61, 1.442695
  %v73 = vpow.pop %v72
  %v74 = vmul.f32 %v62, 1.442695
  %v75 = vpow.pop %v74
  %v76 = vmul.f32 %v63, 1.442695
  %v77 = vpow.pop %v76
  %v78 = vmul.f32 %v64, 1.442695
  %v79 = vpow.pop %v78
  %v80 = vmul.f32 %v65, 1.442695
  %v81 = vpow.pop %v80
  %v82 = vadd.f32 %v67, 1.0
  %v83 = vadd.f32 %v69, 1.0
  %v84 = vadd.f32 %v71, 1.0
  %v85 = vadd.f32 %v73, 1.0
  %v86 = vadd.f32 %v75, 1.0
  %v87 = vadd.f32 %v77, 1.0
  %v88 = vadd.f32 %v79, 1.0
  %v89 = vadd.f32 %v81, 1.0
  %v90 = vrcp.pop %v82
  %v91 = vmul.f32 1.0, %v90
  %v92 = vrcp.pop %v83
  %v93 = vmul.f32 1.0, %v92
  %v94 = vrcp.pop %v84
  %v95 = vmul.f32 1.0, %v94
  %v96 = vrcp.pop %v85
  %v97 = vmul.f32 1.0, %v96
  %v98 = vrcp.pop %v86
  %v99 = vmul.f32 1.0, %v98
  %v100 = vrcp.pop %v87
  %v101 = vmul.f32 1.0, %v100
  %v102 = vrcp.pop %v88
  %v103 = vmul.f32 1.0, %v102
  %v104 = vrcp.pop %v89
  %v105 = vmul.f32 1.0, %v104
  %s106 = scalar_lea.vmem %s1, 128
  %107 = vst [vmem:[%s106] sm:$0xff] %v91
  %108 = vst [vmem:[%s106 + $0x8] sm:$0xff] %v93
  %109 = vst [vmem:[%s106 + $0x10] sm:$0xff] %v95
  %110 = vst [vmem:[%s106 + $0x18] sm:$0xff] %v97
  %111 = vst [vmem:[%s106 + $0x20] sm:$0xff] %v99
  %112 = vst [vmem:[%s106 + $0x28] sm:$0xff] %v101
  %113 = vst [vmem:[%s106 + $0x30] sm:$0xff] %v103
  %114 = vst [vmem:[%s106 + $0x38] sm:$0xff] %v105
  // Predicated region
  $region6: #{dbhead_forward.3} parent=0 // pred_check
    _
  $region7: #{dbhead_forward.3} parent=0 // pred_check_branch
    %116 = sbr.rel (0) target = $region9
  $region8: #{dbhead_forward.3} parent=0 // pred_region
    _
  $region9: #{dbhead_forward.3} parent=0 // pred_fallthru
    _
  // Predicated region
  $region10: #{dbhead_forward.3} parent=0 // pred_check
    _
  $region11: #{dbhead_forward.3} parent=0 // pred_check_branch
    %118 = sbr.rel (0) target = $region13
  $region12: #{dbhead_forward.3} parent=0 // pred_region
    _
  $region13: #{dbhead_forward.3} parent=0 // pred_fallthru
    _

// kernel: dbhead_forward.2
$region0: #{dbhead_forward.2}
  #allocation0 [shape = 'u32[]', space=smem, size = 0x4, offset = 0x4, fixed_abs, tag = 'smem constant byte address 0x4 - core index']
  #allocation1 [shape = 'u32[144,128]{1,0:T(1,128)}', space=vmem, size = 0x12000, scoped, tag = 'internal scratch']
  %s0 = inlined_call_operand.vmem [shape: f32[144,512], index: 0, kind: input, shape index: {}]
  %s1 = inlined_call_operand.vmem [shape: f32[2,4,144], index: 1, kind: input, shape index: {}]
  %s2 = inlined_call_operand.vmem [shape: f32[2,4,1], index: 2, kind: input, shape index: {}]
  %s3 = inlined_call_operand.vmem [shape: f32[2,4,1], index: 3, kind: input, shape index: {}]
  %s4 = inlined_call_operand.vmem [shape: f32[2,16,4], index: 4, kind: input, shape index: {}]
  %s5 = inlined_call_operand.vmem [shape: f32[2,16,1], index: 5, kind: input, shape index: {}]
  %s6 = inlined_call_operand.vmem [shape: f32[2,16,1], index: 6, kind: input, shape index: {}]
  %s7 = inlined_call_operand.vmem [shape: f32[2,16,1], index: 7, kind: input, shape index: {}]
  %s8 = inlined_call_operand.vmem [shape: f32[2,16,16], index: 8, kind: input, shape index: {}]
  %s9 = inlined_call_operand.vmem [shape: f32[2,16,1], index: 9, kind: input, shape index: {}]
  %s10 = inlined_call_operand.vmem [shape: f32[2,16,512], index: 10, kind: output, shape index: {}]
  %s11 = sld [smem:[#allocation0]]
  $region73: #{dbhead_forward.2} parent=0
    _
  %s13 = ssub.s32 1, %s11
  %s14 = scalar_select 0, %s13, %s11
  loop: start=0, step=1, limit=4
  $region2: #{dbhead_forward.2} parent=0 // loop_pre_header
    _
  $region3: #{dbhead_forward.2} parent=0 // loop_header
    %s16 = sphi 0, %s20
    %p17 = scmp.ge.s32.totalorder %s16, 4
    %s24 = sphi 0, %s24
    %s26 = sphi 0, %s24
    %s27 = sphi 0, %s26
    %s41 = sphi 0, %s27
    %s47 = sphi 0, %s49
    %s50 = sphi 0, %s47
    %s51 = sphi 0, %s50
    %s67 = sphi 0, %s51
    %s73 = sphi 0, %s75
    %s76 = sphi 0, %s73
    %s77 = sphi 0, %s76
    %s93 = sphi 0, %s77
    %s99 = sphi 0, %s101
    %s102 = sphi 0, %s99
    %s103 = sphi 0, %s102
    %s119 = sphi 0, %s103
    %s125 = sphi 0, %s127
    %s128 = sphi 0, %s125
    %s129 = sphi 0, %s128
    %s145 = sphi 0, %s129
    %s151 = sphi 0, %s153
    %s154 = sphi 0, %s151
    %s155 = sphi 0, %s154
    %s171 = sphi 0, %s155
    %s177 = sphi 0, %s179
    %s180 = sphi 0, %s177
    %s181 = sphi 0, %s180
    %s197 = sphi 0, %s181
    %s203 = sphi 0, %s205
    %s206 = sphi 0, %s203
    %s207 = sphi 0, %s206
    %s223 = sphi 0, %s207
    %s229 = sphi 0, %s231
    %s232 = sphi 0, %s229
    %s233 = sphi 0, %s232
    %s249 = sphi 0, %s233
    %s255 = sphi 0, %s257
    %s258 = sphi 0, %s255
    %s259 = sphi 0, %s258
    %s275 = sphi 0, %s259
    %s281 = sphi 0, %s283
    %s284 = sphi 0, %s281
    %s285 = sphi 0, %s284
    %s301 = sphi 0, %s285
  $region4: #{dbhead_forward.2} parent=0 // loop_header_branch
    %19 = sbr.rel (%p17) target = $region8
  $region5: #{dbhead_forward.2} parent=0 // loop_body
    %s21 = ssub.s32 %s16, 1
    %s22 = ssub.s32 %s16, 2
    %s23 = sadd.s32 %s16, 1
    %s25 = sadd.s32 %s24, 1
    %p28 = scmp.eq.s32.totalorder %s16, 1
    %p29 = scmp.ne.s32.totalorder %s24, %s26
    %p30 = scmp.eq.s32.totalorder %s16, 0
    %p31 = por %p29, %p30
    %p32 = scmp.ne.s32.totalorder %s24, %s26
    %p33 = scmp.eq.s32.totalorder %s21, 1
    %p34 = por %p32, %p33
    %p35 = scmp.ne.s32.totalorder %s26, %s27
    %p36 = scmp.eq.s32.totalorder %s21, 0
    %p37 = por %p35, %p36
    %p38 = scmp.ne.s32.totalorder %s26, %s27
    %p39 = scmp.eq.s32.totalorder %s22, 1
    %p40 = por %p38, %p39
    %p42 = scmp.ne.s32.totalorder %s27, %s41
    %p43 = scmp.eq.s32.totalorder %s22, 0
    %p44 = por %p42, %p43
    %s45 = ssub.s32 %s16, %s23
    %p46 = scmp.eq.s32.totalorder %s45, 0
    %s48 = sadd.s32 %s47, 1
    %s49 = scalar_select %p46, %s47, %s48
    %p52 = pneg %p46
    %p53 = scmp.eq.s32.totalorder %s16, 1
    %p54 = por %p52, %p53
    %p55 = scmp.ne.s32.totalorder %s47, %s50
    %p56 = scmp.eq.s32.totalorder %s16, 0
    %p57 = por %p55, %p56
    %p58 = scmp.ne.s32.totalorder %s47, %s50
    %p59 = scmp.eq.s32.totalorder %s21, 1
    %p60 = por %p58, %p59
    %p61 = scmp.ne.s32.totalorder %s50, %s51
    %p62 = scmp.eq.s32.totalorder %s21, 0
    %p63 = por %p61, %p62
    %p64 = scmp.ne.s32.totalorder %s50, %s51
    %p65 = scmp.eq.s32.totalorder %s22, 1
    %p66 = por %p64, %p65
    %p68 = scmp.ne.s32.totalorder %s51, %s67
    %p69 = scmp.eq.s32.totalorder %s22, 0
    %p70 = por %p68, %p69
    %s71 = ssub.s32 %s16, %s23
    %p72 = scmp.eq.s32.totalorder %s71, 0
    %s74 = sadd.s32 %s73, 1
    %s75 = scalar_select %p72, %s73, %s74
    %p78 = pneg %p72
    %p79 = scmp.eq.s32.totalorder %s16, 1
    %p80 = por %p78, %p79
    %p81 = scmp.ne.s32.totalorder %s73, %s76
    %p82 = scmp.eq.s32.totalorder %s16, 0
    %p83 = por %p81, %p82
    %p84 = scmp.ne.s32.totalorder %s73, %s76
    %p85 = scmp.eq.s32.totalorder %s21, 1
    %p86 = por %p84, %p85
    %p87 = scmp.ne.s32.totalorder %s76, %s77
    %p88 = scmp.eq.s32.totalorder %s21, 0
    %p89 = por %p87, %p88
    %p90 = scmp.ne.s32.totalorder %s76, %s77
    %p91 = scmp.eq.s32.totalorder %s22, 1
    %p92 = por %p90, %p91
    %p94 = scmp.ne.s32.totalorder %s77, %s93
    %p95 = scmp.eq.s32.totalorder %s22, 0
    %p96 = por %p94, %p95
    %s97 = ssub.s32 %s16, %s23
    %p98 = scmp.eq.s32.totalorder %s97, 0
    %s100 = sadd.s32 %s99, 1
    %s101 = scalar_select %p98, %s99, %s100
    %p104 = pneg %p98
    %p105 = scmp.eq.s32.totalorder %s16, 1
    %p106 = por %p104, %p105
    %p107 = scmp.ne.s32.totalorder %s99, %s102
    %p108 = scmp.eq.s32.totalorder %s16, 0
    %p109 = por %p107, %p108
    %p110 = scmp.ne.s32.totalorder %s99, %s102
    %p111 = scmp.eq.s32.totalorder %s21, 1
    %p112 = por %p110, %p111
    %p113 = scmp.ne.s32.totalorder %s102, %s103
    %p114 = scmp.eq.s32.totalorder %s21, 0
    %p115 = por %p113, %p114
    %p116 = scmp.ne.s32.totalorder %s102, %s103
    %p117 = scmp.eq.s32.totalorder %s22, 1
    %p118 = por %p116, %p117
    %p120 = scmp.ne.s32.totalorder %s103, %s119
    %p121 = scmp.eq.s32.totalorder %s22, 0
    %p122 = por %p120, %p121
    %s123 = ssub.s32 %s16, %s23
    %p124 = scmp.eq.s32.totalorder %s123, 0
    %s126 = sadd.s32 %s125, 1
    %s127 = scalar_select %p124, %s125, %s126
    %p130 = pneg %p124
    %p131 = scmp.eq.s32.totalorder %s16, 1
    %p132 = por %p130, %p131
    %p133 = scmp.ne.s32.totalorder %s125, %s128
    %p134 = scmp.eq.s32.totalorder %s16, 0
    %p135 = por %p133, %p134
    %p136 = scmp.ne.s32.totalorder %s125, %s128
    %p137 = scmp.eq.s32.totalorder %s21, 1
    %p138 = por %p136, %p137
    %p139 = scmp.ne.s32.totalorder %s128, %s129
    %p140 = scmp.eq.s32.totalorder %s21, 0
    %p141 = por %p139, %p140
    %p142 = scmp.ne.s32.totalorder %s128, %s129
    %p143 = scmp.eq.s32.totalorder %s22, 1
    %p144 = por %p142, %p143
    %p146 = scmp.ne.s32.totalorder %s129, %s145
    %p147 = scmp.eq.s32.totalorder %s22, 0
    %p148 = por %p146, %p147
    %s149 = ssub.s32 %s16, %s23
    %p150 = scmp.eq.s32.totalorder %s149, 0
    %s152 = sadd.s32 %s151, 1
    %s153 = scalar_select %p150, %s151, %s152
    %p156 = pneg %p150
    %p157 = scmp.eq.s32.totalorder %s16, 1
    %p158 = por %p156, %p157
    %p159 = scmp.ne.s32.totalorder %s151, %s154
    %p160 = scmp.eq.s32.totalorder %s16, 0
    %p161 = por %p159, %p160
    %p162 = scmp.ne.s32.totalorder %s151, %s154
    %p163 = scmp.eq.s32.totalorder %s21, 1
    %p164 = por %p162, %p163
    %p165 = scmp.ne.s32.totalorder %s154, %s155
    %p166 = scmp.eq.s32.totalorder %s21, 0
    %p167 = por %p165, %p166
    %p168 = scmp.ne.s32.totalorder %s154, %s155
    %p169 = scmp.eq.s32.totalorder %s22, 1
    %p170 = por %p168, %p169
    %p172 = scmp.ne.s32.totalorder %s155, %s171
    %p173 = scmp.eq.s32.totalorder %s22, 0
    %p174 = por %p172, %p173
    %s175 = ssub.s32 %s16, %s23
    %p176 = scmp.eq.s32.totalorder %s175, 0
    %s178 = sadd.s32 %s177, 1
    %s179 = scalar_select %p176, %s177, %s178
    %p182 = pneg %p176
    %p183 = scmp.eq.s32.totalorder %s16, 1
    %p184 = por %p182, %p183
    %p185 = scmp.ne.s32.totalorder %s177, %s180
    %p186 = scmp.eq.s32.totalorder %s16, 0
    %p187 = por %p185, %p186
    %p188 = scmp.ne.s32.totalorder %s177, %s180
    %p189 = scmp.eq.s32.totalorder %s21, 1
    %p190 = por %p188, %p189
    %p191 = scmp.ne.s32.totalorder %s180, %s181
    %p192 = scmp.eq.s32.totalorder %s21, 0
    %p193 = por %p191, %p192
    %p194 = scmp.ne.s32.totalorder %s180, %s181
    %p195 = scmp.eq.s32.totalorder %s22, 1
    %p196 = por %p194, %p195
    %p198 = scmp.ne.s32.totalorder %s181, %s197
    %p199 = scmp.eq.s32.totalorder %s22, 0
    %p200 = por %p198, %p199
    %s201 = ssub.s32 %s16, %s23
    %p202 = scmp.eq.s32.totalorder %s201, 0
    %s204 = sadd.s32 %s203, 1
    %s205 = scalar_select %p202, %s203, %s204
    %p208 = pneg %p202
    %p209 = scmp.eq.s32.totalorder %s16, 1
    %p210 = por %p208, %p209
    %p211 = scmp.ne.s32.totalorder %s203, %s206
    %p212 = scmp.eq.s32.totalorder %s16, 0
    %p213 = por %p211, %p212
    %p214 = scmp.ne.s32.totalorder %s203, %s206
    %p215 = scmp.eq.s32.totalorder %s21, 1
    %p216 = por %p214, %p215
    %p217 = scmp.ne.s32.totalorder %s206, %s207
    %p218 = scmp.eq.s32.totalorder %s21, 0
    %p219 = por %p217, %p218
    %p220 = scmp.ne.s32.totalorder %s206, %s207
    %p221 = scmp.eq.s32.totalorder %s22, 1
    %p222 = por %p220, %p221
    %p224 = scmp.ne.s32.totalorder %s207, %s223
    %p225 = scmp.eq.s32.totalorder %s22, 0
    %p226 = por %p224, %p225
    %s227 = ssub.s32 %s16, %s23
    %p228 = scmp.eq.s32.totalorder %s227, 0
    %s230 = sadd.s32 %s229, 1
    %s231 = scalar_select %p228, %s229, %s230
    %p234 = pneg %p228
    %p235 = scmp.eq.s32.totalorder %s16, 1
    %p236 = por %p234, %p235
    %p237 = scmp.ne.s32.totalorder %s229, %s232
    %p238 = scmp.eq.s32.totalorder %s16, 0
    %p239 = por %p237, %p238
    %p240 = scmp.ne.s32.totalorder %s229, %s232
    %p241 = scmp.eq.s32.totalorder %s21, 1
    %p242 = por %p240, %p241
    %p243 = scmp.ne.s32.totalorder %s232, %s233
    %p244 = scmp.eq.s32.totalorder %s21, 0
    %p245 = por %p243, %p244
    %p246 = scmp.ne.s32.totalorder %s232, %s233
    %p247 = scmp.eq.s32.totalorder %s22, 1
    %p248 = por %p246, %p247
    %p250 = scmp.ne.s32.totalorder %s233, %s249
    %p251 = scmp.eq.s32.totalorder %s22, 0
    %p252 = por %p250, %p251
    %s253 = ssub.s32 %s16, %s23
    %p254 = scmp.eq.s32.totalorder %s253, 0
    %s256 = sadd.s32 %s255, 1
    %s257 = scalar_select %p254, %s255, %s256
    %p260 = pneg %p254
    %p261 = scmp.eq.s32.totalorder %s16, 1
    %p262 = por %p260, %p261
    %p263 = scmp.ne.s32.totalorder %s255, %s258
    %p264 = scmp.eq.s32.totalorder %s16, 0
    %p265 = por %p263, %p264
    %p266 = scmp.ne.s32.totalorder %s255, %s258
    %p267 = scmp.eq.s32.totalorder %s21, 1
    %p268 = por %p266, %p267
    %p269 = scmp.ne.s32.totalorder %s258, %s259
    %p270 = scmp.eq.s32.totalorder %s21, 0
    %p271 = por %p269, %p270
    %p272 = scmp.ne.s32.totalorder %s258, %s259
    %p273 = scmp.eq.s32.totalorder %s22, 1
    %p274 = por %p272, %p273
    %p276 = scmp.ne.s32.totalorder %s259, %s275
    %p277 = scmp.eq.s32.totalorder %s22, 0
    %p278 = por %p276, %p277
    %s279 = ssub.s32 %s16, %s23
    %p280 = scmp.eq.s32.totalorder %s279, 0
    %s282 = sadd.s32 %s281, 1
    %s283 = scalar_select %p280, %s281, %s282
    %p286 = pneg %p280
    %p287 = scmp.eq.s32.totalorder %s16, 1
    %p288 = por %p286, %p287
    %p289 = scmp.ne.s32.totalorder %s281, %s284
    %p290 = scmp.eq.s32.totalorder %s16, 0
    %p291 = por %p289, %p290
    %p292 = scmp.ne.s32.totalorder %s281, %s284
    %p293 = scmp.eq.s32.totalorder %s21, 1
    %p294 = por %p292, %p293
    %p295 = scmp.ne.s32.totalorder %s284, %s285
    %p296 = scmp.eq.s32.totalorder %s21, 0
    %p297 = por %p295, %p296
    %p298 = scmp.ne.s32.totalorder %s284, %s285
    %p299 = scmp.eq.s32.totalorder %s22, 1
    %p300 = por %p298, %p299
    %p302 = scmp.ne.s32.totalorder %s285, %s301
    %p303 = scmp.eq.s32.totalorder %s22, 0
    %p304 = por %p302, %p303
    %p305 = scmp.le.s32.totalorder 1, %s16
    %p306 = scmp.lt.s32.totalorder %s16, 3
    %p307 = pnand %p305, %p306
    %p308 = pneg %p307
    // Predicated region
    $region9: #{dbhead_forward.2} parent=5 // pred_check
      _
    $region10: #{dbhead_forward.2} parent=5 // pred_check_branch
      %310 = sbr.rel (%p307) target = $region12
    $region11: #{dbhead_forward.2} parent=5 // pred_region
      %s311 = ssub.s32 %s16, 1
      // Predicated region
      $region13: #{dbhead_forward.2} parent=11 // pred_check
        %p312 = pneg %p37
      $region14: #{dbhead_forward.2} parent=11 // pred_check_branch
        %314 = sbr.rel (%p312) target = $region16
      $region15: #{dbhead_forward.2} parent=11 // pred_region
        _
      $region16: #{dbhead_forward.2} parent=11 // pred_fallthru
        _
    $region12: #{dbhead_forward.2} parent=5 // pred_fallthru
      _
    %p315 = scmp.lt.s32.totalorder %s16, 2
    // Predicated region
    $region17: #{dbhead_forward.2} parent=5 // pred_check
      %p316 = pneg %p315
    $region18: #{dbhead_forward.2} parent=5 // pred_check_branch
      %318 = sbr.rel (%p316) target = $region20
    $region19: #{dbhead_forward.2} parent=5 // pred_region
      // Predicated region
      $region21: #{dbhead_forward.2} parent=19 // pred_check
        %p319 = pneg %p57
      $region22: #{dbhead_forward.2} parent=19 // pred_check_branch
        %321 = sbr.rel (%p319) target = $region24
      $region23: #{dbhead_forward.2} parent=19 // pred_region
        %p322 = scmp.lt.s32.totalorder %s16, 1
        %s323 = scalar_select %p322, %s16, 1
        %s324 = smul.addr %s323, 2
        %s325 = smul.addr %s324, 4
        %s326 = scalar_lea.vmem %s1, %s325
      $region24: #{dbhead_forward.2} parent=19 // pred_fallthru
        _
      // Predicated region
      $region25: #{dbhead_forward.2} parent=19 // pred_check
        %p327 = pneg %p83
      $region26: #{dbhead_forward.2} parent=19 // pred_check_branch
        %329 = sbr.rel (%p327) target = $region28
      $region27: #{dbhead_forward.2} parent=19 // pred_region
        %p330 = scmp.lt.s32.totalorder %s16, 1
        %s331 = scalar_select %p330, %s16, 1
        %s332 = smul.addr %s331, 4
        %s333 = scalar_lea.vmem %s2, %s332
      $region28: #{dbhead_forward.2} parent=19 // pred_fallthru
        _
      // Predicated region
      $region29: #{dbhead_forward.2} parent=19 // pred_check
        %p334 = pneg %p109
      $region30: #{dbhead_forward.2} parent=19 // pred_check_branch
        %336 = sbr.rel (%p334) target = $region32
      $region31: #{dbhead_forward.2} parent=19 // pred_region
        %p337 = scmp.lt.s32.totalorder %s16, 1
        %s338 = scalar_select %p337, %s16, 1
        %s339 = smul.addr %s338, 4
        %s340 = scalar_lea.vmem %s3, %s339
      $region32: #{dbhead_forward.2} parent=19 // pred_fallthru
        _
      // Predicated region
      $region33: #{dbhead_forward.2} parent=19 // pred_check
        %p341 = pneg %p135
      $region34: #{dbhead_forward.2} parent=19 // pred_check_branch
        %343 = sbr.rel (%p341) target = $region36
      $region35: #{dbhead_forward.2} parent=19 // pred_region
        %p344 = scmp.lt.s32.totalorder %s16, 1
        %s345 = scalar_select %p344, %s16, 1
        %s346 = smul.addr %s345, 2
        %s347 = smul.addr %s346, 8
        %s348 = scalar_lea.vmem %s4, %s347
      $region36: #{dbhead_forward.2} parent=19 // pred_fallthru
        _
      // Predicated region
      $region37: #{dbhead_forward.2} parent=19 // pred_check
        %p349 = pneg %p161
      $region38: #{dbhead_forward.2} parent=19 // pred_check_branch
        %351 = sbr.rel (%p349) target = $region40
      $region39: #{dbhead_forward.2} parent=19 // pred_region
        %p352 = scmp.lt.s32.totalorder %s16, 1
        %s353 = scalar_select %p352, %s16, 1
        %s354 = smul.addr %s353, 2
        %s355 = smul.addr %s354, 8
        %s356 = scalar_lea.vmem %s5, %s355
      $region40: #{dbhead_forward.2} parent=19 // pred_fallthru
        _
      // Predicated region
      $region41: #{dbhead_forward.2} parent=19 // pred_check
        %p357 = pneg %p187
      $region42: #{dbhead_forward.2} parent=19 // pred_check_branch
        %359 = sbr.rel (%p357) target = $region44
      $region43: #{dbhead_forward.2} parent=19 // pred_region
        %p360 = scmp.lt.s32.totalorder %s16, 1
        %s361 = scalar_select %p360, %s16, 1
        %s362 = smul.addr %s361, 2
        %s363 = smul.addr %s362, 8
        %s364 = scalar_lea.vmem %s6, %s363
      $region44: #{dbhead_forward.2} parent=19 // pred_fallthru
        _
      // Predicated region
      $region45: #{dbhead_forward.2} parent=19 // pred_check
        %p365 = pneg %p213
      $region46: #{dbhead_forward.2} parent=19 // pred_check_branch
        %367 = sbr.rel (%p365) target = $region48
      $region47: #{dbhead_forward.2} parent=19 // pred_region
        %p368 = scmp.lt.s32.totalorder %s16, 1
        %s369 = scalar_select %p368, %s16, 1
        %s370 = smul.addr %s369, 2
        %s371 = smul.addr %s370, 8
        %s372 = scalar_lea.vmem %s7, %s371
      $region48: #{dbhead_forward.2} parent=19 // pred_fallthru
        _
      // Predicated region
      $region49: #{dbhead_forward.2} parent=19 // pred_check
        %p373 = pneg %p239
      $region50: #{dbhead_forward.2} parent=19 // pred_check_branch
        %375 = sbr.rel (%p373) target = $region52
      $region51: #{dbhead_forward.2} parent=19 // pred_region
        %p376 = scmp.lt.s32.totalorder %s16, 1
        %s377 = scalar_select %p376, %s16, 1
        %s378 = smul.addr %s377, 2
        %s379 = smul.addr %s378, 8
        %s380 = scalar_lea.vmem %s8, %s379
      $region52: #{dbhead_forward.2} parent=19 // pred_fallthru
        _
      // Predicated region
      $region53: #{dbhead_forward.2} parent=19 // pred_check
        %p381 = pneg %p265
      $region54: #{dbhead_forward.2} parent=19 // pred_check_branch
        %383 = sbr.rel (%p381) target = $region56
      $region55: #{dbhead_forward.2} parent=19 // pred_region
        %p384 = scmp.lt.s32.totalorder %s16, 1
        %s385 = scalar_select %p384, %s16, 1
        %s386 = smul.addr %s385, 2
        %s387 = smul.addr %s386, 8
        %s388 = scalar_lea.vmem %s9, %s387
      $region56: #{dbhead_forward.2} parent=19 // pred_fallthru
        _
    $region20: #{dbhead_forward.2} parent=5 // pred_fallthru
      _
    %p389 = scmp.le.s32.totalorder 1, %s16
    %p390 = scmp.lt.s32.totalorder %s16, 3
    %p391 = pnand %p389, %p390
    %p392 = pneg %p391
    // Predicated region
    $region57: #{dbhead_forward.2} parent=5 // pred_check
      _
    $region58: #{dbhead_forward.2} parent=5 // pred_check_branch
      %394 = sbr.rel (%p391) target = $region60
    $region59: #{dbhead_forward.2} parent=5 // pred_region
      %s395 = ssub.s32 %s16, 1
      %p396 = pneg %p37
      %p397 = pneg %p34
      %p398 = scmp.lt.s32.totalorder %s21, 1
      %s399 = scalar_select %p398, %s21, 1
      %s400 = smul.addr %s399, 2
      %s401 = smul.addr %s400, 4
      %s402 = scalar_lea.vmem %s1, %s401
      %p403 = pneg %p63
      %p404 = pneg %p60
      %p405 = scmp.lt.s32.totalorder %s21, 1
      %s406 = scalar_select %p405, %s21, 1
      %s407 = smul.addr %s406, 4
      %s408 = scalar_lea.vmem %s2, %s407
      %p409 = pneg %p89
      %p410 = pneg %p86
      %p411 = scmp.lt.s32.totalorder %s21, 1
      %s412 = scalar_select %p411, %s21, 1
      %s413 = smul.addr %s412, 4
      %s414 = scalar_lea.vmem %s3, %s413
      %p415 = pneg %p115
      %p416 = pneg %p112
      %p417 = scmp.lt.s32.totalorder %s21, 1
      %s418 = scalar_select %p417, %s21, 1
      %s419 = smul.addr %s418, 2
      %s420 = smul.addr %s419, 8
      %s421 = scalar_lea.vmem %s4, %s420
      %p422 = pneg %p141
      %p423 = pneg %p138
      %p424 = scmp.lt.s32.totalorder %s21, 1
      %s425 = scalar_select %p424, %s21, 1
      %s426 = smul.addr %s425, 2
      %s427 = smul.addr %s426, 8
      %s428 = scalar_lea.vmem %s5, %s427
      %p429 = pneg %p167
      %p430 = pneg %p164
      %p431 = scmp.lt.s32.totalorder %s21, 1
      %s432 = scalar_select %p431, %s21, 1
      %s433 = smul.addr %s432, 2
      %s434 = smul.addr %s433, 8
      %s435 = scalar_lea.vmem %s6, %s434
      %p436 = pneg %p193
      %p437 = pneg %p190
      %p438 = scmp.lt.s32.totalorder %s21, 1
      %s439 = scalar_select %p438, %s21, 1
      %s440 = smul.addr %s439, 2
      %s441 = smul.addr %s440, 8
      %s442 = scalar_lea.vmem %s7, %s441
      %p443 = pneg %p219
      %p444 = pneg %p216
      %p445 = scmp.lt.s32.totalorder %s21, 1
      %s446 = scalar_select %p445, %s21, 1
      %s447 = smul.addr %s446, 2
      %s448 = smul.addr %s447, 8
      %s449 = scalar_lea.vmem %s8, %s448
      %p450 = pneg %p245
      %p451 = pneg %p242
      %p452 = scmp.lt.s32.totalorder %s21, 1
      %s453 = scalar_select %p452, %s21, 1
      %s454 = smul.addr %s453, 2
      %s455 = smul.addr %s454, 8
      %s456 = scalar_lea.vmem %s9, %s455
      %p457 = pneg %p271
      %p458 = pneg %p268
      %p459 = pneg %p297
      %p460 = pneg %p294
      %p461 = scmp.lt.s32.totalorder %s21, 1
      %s462 = scalar_select %p461, %s21, 1
      %s463 = smul.addr %s462, 8
      %s464 = smul.addr %s463, 8
      %s465 = scalar_lea.vmem %s10, %s464
      %p466 = scmp.lt.s32.totalorder %s21, 1
      %s467 = scalar_select %p466, %s21, 1
      %s468 = smul.addr %s467, 2
      %s469 = smul.addr %s468, 4
      %s470 = scalar_lea.vmem %s1, %s469
      %p471 = scmp.lt.s32.totalorder %s21, 1
      %s472 = scalar_select %p471, %s21, 1
      %s473 = smul.addr %s472, 4
      %s474 = scalar_lea.vmem %s2, %s473
      %p475 = scmp.lt.s32.totalorder %s21, 1
      %s476 = scalar_select %p475, %s21, 1
      %s477 = smul.addr %s476, 4
      %s478 = scalar_lea.vmem %s3, %s477
      %p479 = scmp.lt.s32.totalorder %s21, 1
      %s480 = scalar_select %p479, %s21, 1
      %s481 = smul.addr %s480, 2
      %s482 = smul.addr %s481, 8
      %s483 = scalar_lea.vmem %s4, %s482
      %p484 = scmp.lt.s32.totalorder %s21, 1
      %s485 = scalar_select %p484, %s21, 1
      %s486 = smul.addr %s485, 2
      %s487 = smul.addr %s486, 8
      %s488 = scalar_lea.vmem %s5, %s487
      %p489 = scmp.lt.s32.totalorder %s21, 1
      %s490 = scalar_select %p489, %s21, 1
      %s491 = smul.addr %s490, 2
      %s492 = smul.addr %s491, 8
      %s493 = scalar_lea.vmem %s6, %s492
      %p494 = scmp.lt.s32.totalorder %s21, 1
      %s495 = scalar_select %p494, %s21, 1
      %s496 = smul.addr %s495, 2
      %s497 = smul.addr %s496, 8
      %s498 = scalar_lea.vmem %s7, %s497
      %p499 = scmp.lt.s32.totalorder %s21, 1
      %s500 = scalar_select %p499, %s21, 1
      %s501 = smul.addr %s500, 2
      %s502 = smul.addr %s501, 8
      %s503 = scalar_lea.vmem %s8, %s502
      %p504 = scmp.lt.s32.totalorder %s21, 1
      %s505 = scalar_select %p504, %s21, 1
      %s506 = smul.addr %s505, 2
      %s507 = smul.addr %s506, 8
      %s508 = scalar_lea.vmem %s9, %s507
      %p509 = scmp.lt.s32.totalorder %s21, 1
      %s510 = scalar_select %p509, %s21, 1
      %s511 = smul.addr %s510, 8
      %s512 = smul.addr %s511, 8
      %s513 = scalar_lea.vmem %s10, %s512
      %v514 = vld [vmem:[%s0] sm:$0xff]
      %v515 = vld [vmem:[%s0 + $0x8] sm:$0xff]
      %v516 = vld [vmem:[%s0 + $0x10] sm:$0xff]
      %v517 = vld [vmem:[%s0 + $0x18] sm:$0xff]
      %v518 = vld [vmem:[%s0 + $0x20] sm:$0xff]
      %v519 = vld [vmem:[%s0 + $0x28] sm:$0xff]
      %v520 = vld [vmem:[%s0 + $0x30] sm:$0xff]
      %v521 = vld [vmem:[%s0 + $0x38] sm:$0xff]
      %v522 = vld [vmem:[%s0 + $0x40] sm:$0xff]
      %v523 = vld [vmem:[%s0 + $0x48] sm:$0xff]
      %v524 = vld [vmem:[%s0 + $0x50] sm:$0xff]
      %v525 = vld [vmem:[%s0 + $0x58] sm:$0xff]
      %v526 = vld [vmem:[%s0 + $0x60] sm:$0xff]
      %v527 = vld [vmem:[%s0 + $0x68] sm:$0xff]
      %v528 = vld [vmem:[%s0 + $0x70] sm:$0xff]
      %v529 = vld [vmem:[%s0 + $0x78] sm:$0xff]
      %v530 = vld [vmem:[%s0 + $0x80] sm:$0xff]
      %v531 = vld [vmem:[%s0 + $0x88] sm:$0xff]
      %v532 = vld [vmem:[%s0 + $0x90] sm:$0xff]
      %v533 = vld [vmem:[%s0 + $0x98] sm:$0xff]
      %v534 = vld [vmem:[%s0 + $0xa0] sm:$0xff]
      %v535 = vld [vmem:[%s0 + $0xa8] sm:$0xff]
      %v536 = vld [vmem:[%s0 + $0xb0] sm:$0xff]
      %v537 = vld [vmem:[%s0 + $0xb8] sm:$0xff]
      %v538 = vld [vmem:[%s0 + $0xc0] sm:$0xff]
      %v539 = vld [vmem:[%s0 + $0xc8] sm:$0xff]
      %v540 = vld [vmem:[%s0 + $0xd0] sm:$0xff]
      %v541 = vld [vmem:[%s0 + $0xd8] sm:$0xff]
      %v542 = vld [vmem:[%s0 + $0xe0] sm:$0xff]
      %v543 = vld [vmem:[%s0 + $0xe8] sm:$0xff]
      %v544 = vld [vmem:[%s0 + $0xf0] sm:$0xff]
      %v545 = vld [vmem:[%s0 + $0xf8] sm:$0xff]
      %v546 = vld [vmem:[%s0 + $0x100] sm:$0xff]
      %v547 = vld [vmem:[%s0 + $0x108] sm:$0xff]
      %v548 = vld [vmem:[%s0 + $0x110] sm:$0xff]
      %v549 = vld [vmem:[%s0 + $0x118] sm:$0xff]
      %v550 = vld [vmem:[%s0 + $0x120] sm:$0xff]
      %v551 = vld [vmem:[%s0 + $0x128] sm:$0xff]
      %v552 = vld [vmem:[%s0 + $0x130] sm:$0xff]
      %v553 = vld [vmem:[%s0 + $0x138] sm:$0xff]
      %v554 = vld [vmem:[%s0 + $0x140] sm:$0xff]
      %v555 = vld [vmem:[%s0 + $0x148] sm:$0xff]
      %v556 = vld [vmem:[%s0 + $0x150] sm:$0xff]
      %v557 = vld [vmem:[%s0 + $0x158] sm:$0xff]
      %v558 = vld [vmem:[%s0 + $0x160] sm:$0xff]
      %v559 = vld [vmem:[%s0 + $0x168] sm:$0xff]
      %v560 = vld [vmem:[%s0 + $0x170] sm:$0xff]
      %v561 = vld [vmem:[%s0 + $0x178] sm:$0xff]
      %v562 = vld [vmem:[%s0 + $0x180] sm:$0xff]
      %v563 = vld [vmem:[%s0 + $0x188] sm:$0xff]
      %v564 = vld [vmem:[%s0 + $0x190] sm:$0xff]
      %v565 = vld [vmem:[%s0 + $0x198] sm:$0xff]
      %v566 = vld [vmem:[%s0 + $0x1a0] sm:$0xff]
      %v567 = vld [vmem:[%s0 + $0x1a8] sm:$0xff]
      %v568 = vld [vmem:[%s0 + $0x1b0] sm:$0xff]
      %v569 = vld [vmem:[%s0 + $0x1b8] sm:$0xff]
      %v570 = vld [vmem:[%s0 + $0x1c0] sm:$0xff]
      %v571 = vld [vmem:[%s0 + $0x1c8] sm:$0xff]
      %v572 = vld [vmem:[%s0 + $0x1d0] sm:$0xff]
      %v573 = vld [vmem:[%s0 + $0x1d8] sm:$0xff]
      %v574 = vld [vmem:[%s0 + $0x1e0] sm:$0xff]
      %v575 = vld [vmem:[%s0 + $0x1e8] sm:$0xff]
      %v576 = vld [vmem:[%s0 + $0x1f0] sm:$0xff]
      %v577 = vld [vmem:[%s0 + $0x1f8] sm:$0xff]
      %v578 = vld [vmem:[%s0 + $0x200] sm:$0xff]
      %v579 = vld [vmem:[%s0 + $0x208] sm:$0xff]
      %v580 = vld [vmem:[%s0 + $0x210] sm:$0xff]
      %v581 = vld [vmem:[%s0 + $0x218] sm:$0xff]
      %v582 = vld [vmem:[%s0 + $0x220] sm:$0xff]
      %v583 = vld [vmem:[%s0 + $0x228] sm:$0xff]
      %v584 = vld [vmem:[%s0 + $0x230] sm:$0xff]
      %v585 = vld [vmem:[%s0 + $0x238] sm:$0xff]
      %v586 = vld [vmem:[%s470] sm:$0xff]
      %v588 = vcombine.high %v586, %v586
      %vm589 = vcmask 130048
      %v590 = vsel %vm589, %v588, 0
      %592 = vmatprep.subr.mxu0 %v575
      %593 = vmatpush1.msra.mxu0 %v574
      %594 = vmatprep.subr.mxu0 %v571
      %595 = vmatpush1.msra.mxu0 %v570
      %596 = vmatprep.subr.mxu0 %v567
      %597 = vmatpush1.msra.mxu0 %v566
      %598 = vmatprep.subr.mxu0 %v563
      %599 = vmatpush1.msra.mxu0 %v562
      %600 = vmatprep.subr.mxu0 %v559
      %601 = vmatpush1.msra.mxu0 %v558
      %602 = vmatprep.subr.mxu0 %v555
      %603 = vmatpush1.msra.mxu0 %v554
      %604 = vmatprep.subr.mxu0 %v551
      %605 = vmatpush1.msra.mxu0 %v550
      %606 = vmatprep.subr.mxu0 %v547
      %607 = vmatpush1.msra.mxu0 %v546
      %608 = vmatprep.subr.mxu0 %v543
      %609 = vmatpush1.msra.mxu0 %v542
      %610 = vmatprep.subr.mxu0 %v539
      %611 = vmatpush1.msra.mxu0 %v538
      %612 = vmatprep.subr.mxu0 %v535
      %613 = vmatpush1.msra.mxu0 %v534
      %614 = vmatprep.subr.mxu0 %v531
      %615 = vmatpush1.msra.mxu0 %v530
      %616 = vmatprep.subr.mxu0 %v527
      %617 = vmatpush1.msra.mxu0 %v526
      %618 = vmatprep.subr.mxu0 %v523
      %619 = vmatpush1.msra.mxu0 %v522
      %620 = vmatprep.subr.mxu0 %v519
      %621 = vmatpush1.msra.mxu0 %v518
      %622 = vmatprep.subr.mxu0 %v515
      %623 = vmatpush1.msra.mxu0 %v514
      %624 = vmatprep.subr.mxu0 0.0
      %625 = vmatpush2.msra.mxu0 0.0
      %626 = vmatprep.subr.mxu0 0.0
      %627 = vmatpush2.msra.mxu0 0.0
      %628 = vmatprep.subr.mxu0 0.0
      %629 = vmatpush2.msra.mxu0 0.0
      %630 = vmatprep.subr.mxu0 0.0
      %631 = vmatpush2.msra.mxu0 0.0
      %632 = vmatprep.subr.mxu0 0.0
      %633 = vmatpush2.msra.mxu0 0.0
      %634 = vmatprep.subr.mxu0 0.0
      %635 = vmatpush2.msra.mxu0 0.0
      %636 = vmatprep.subr.mxu0 0.0
      %637 = vmatpush2.msra.mxu0 0.0
      %638 = vmatprep.subr.mxu0 0.0
      %639 = vmatpush2.msra.mxu0 0.0
      %640 = vmatprep.subr.mxu0 0.0
      %641 = vmatpush2.msra.mxu0 0.0
      %642 = vmatprep.subr.mxu0 0.0
      %643 = vmatpush2.msra.mxu0 0.0
      %644 = vmatprep.subr.mxu0 0.0
      %645 = vmatpush2.msra.mxu0 0.0
      %646 = vmatprep.subr.mxu0 0.0
      %647 = vmatpush2.msra.mxu0 0.0
      %648 = vmatprep.subr.mxu0 0.0
      %649 = vmatpush2.msra.mxu0 0.0
      %650 = vmatprep.subr.mxu0 0.0
      %651 = vmatpush2.msra.mxu0 0.0
      %652 = vmatprep.subr.mxu0 %v583
      %653 = vmatpush2.msra.mxu0 %v582
      %654 = vmatprep.subr.mxu0 %v579
      %655 = vmatpush2.msra.mxu0 %v578
      %656 = vmatprep.mubr.f32.mxu0 %v590
      %657 = vmatmul.mubr.f32.gmra.mxu0 %v586
      %v658 = vpop.f32.mrf.mxu0
      %v659 = vadd.f32 0.0, %v658
      %v660 = vpop.f32.mrf.mxu0
      %v661 = vadd.f32 0.0, %v660
      %662 = vdwg.mxu0
      %663 = vmatprep.subr.mxu0 %v577
      %664 = vmatpush1.msra.mxu0 %v576
      %665 = vmatprep.subr.mxu0 %v573
      %666 = vmatpush1.msra.mxu0 %v572
      %667 = vmatprep.subr.mxu0 %v569
      %668 = vmatpush1.msra.mxu0 %v568
      %669 = vmatprep.subr.mxu0 %v565
      %670 = vmatpush1.msra.mxu0 %v564
      %671 = vmatprep.subr.mxu0 %v561
      %672 = vmatpush1.msra.mxu0 %v560
      %673 = vmatprep.subr.mxu0 %v557
      %674 = vmatpush1.msra.mxu0 %v556
      %675 = vmatprep.subr.mxu0 %v553
      %676 = vmatpush1.msra.mxu0 %v552
      %677 = vmatprep.subr.mxu0 %v549
      %678 = vmatpush1.msra.mxu0 %v548
      %679 = vmatprep.subr.mxu0 %v545
      %680 = vmatpush1.msra.mxu0 %v544
      %681 = vmatprep.subr.mxu0 %v541
      %682 = vmatpush1.msra.mxu0 %v540
      %683 = vmatprep.subr.mxu0 %v537
      %684 = vmatpush1.msra.mxu0 %v536
      %685 = vmatprep.subr.mxu0 %v533
      %686 = vmatpush1.msra.mxu0 %v532
      %687 = vmatprep.subr.mxu0 %v529
      %688 = vmatpush1.msra.mxu0 %v528
      %689 = vmatprep.subr.mxu0 %v525
      %690 = vmatpush1.msra.mxu0 %v524
      %691 = vmatprep.subr.mxu0 %v521
      %692 = vmatpush1.msra.mxu0 %v520
      %693 = vmatprep.subr.mxu0 %v517
      %694 = vmatpush1.msra.mxu0 %v516
      %695 = vmatprep.subr.mxu0 0.0
      %696 = vmatpush2.msra.mxu0 0.0
      %697 = vmatprep.subr.mxu0 0.0
      %698 = vmatpush2.msra.mxu0 0.0
      %699 = vmatprep.subr.mxu0 0.0
      %700 = vmatpush2.msra.mxu0 0.0
      %701 = vmatprep.subr.mxu0 0.0
      %702 = vmatpush2.msra.mxu0 0.0
      %703 = vmatprep.subr.mxu0 0.0
      %704 = vmatpush2.msra.mxu0 0.0
      %705 = vmatprep.subr.mxu0 0.0
      %706 = vmatpush2.msra.mxu0 0.0
      %707 = vmatprep.subr.mxu0 0.0
      %708 = vmatpush2.msra.mxu0 0.0
      %709 = vmatprep.subr.mxu0 0.0
      %710 = vmatpush2.msra.mxu0 0.0
      %711 = vmatprep.subr.mxu0 0.0
      %712 = vmatpush2.msra.mxu0 0.0
      %713 = vmatprep.subr.mxu0 0.0
      %714 = vmatpush2.msra.mxu0 0.0
      %715 = vmatprep.subr.mxu0 0.0
      %716 = vmatpush2.msra.mxu0 0.0
      %717 = vmatprep.subr.mxu0 0.0
      %718 = vmatpush2.msra.mxu0 0.0
      %719 = vmatprep.subr.mxu0 0.0
      %720 = vmatpush2.msra.mxu0 0.0
      %721 = vmatprep.subr.mxu0 0.0
      %722 = vmatpush2.msra.mxu0 0.0
      %723 = vmatprep.subr.mxu0 %v585
      %724 = vmatpush2.msra.mxu0 %v584
      %725 = vmatprep.subr.mxu0 %v581
      %726 = vmatpush2.msra.mxu0 %v580
      %727 = vmatprep.mubr.f32.mxu0 %v590
      %728 = vmatmul.mubr.f32.gmra.mxu0 %v586
      %v729 = vpop.f32.mrf.mxu0
      %v730 = vadd.f32 0.0, %v729
      %v731 = vpop.f32.mrf.mxu0
      %v732 = vadd.f32 0.0, %v731
      %733 = vdwg.mxu0
      %vm734 = vcmask 1043456
      %v735 = vsel %vm734, %v659, 0.0
      %v736 = vsel %vm734, %v661, 0.0
      %v737 = vadd.f32 %v735, %v736
      %v738 = vsel %vm734, %v730, 0.0
      %v739 = vadd.f32 %v737, %v738
      %v740 = vsel %vm734, %v732, 0.0
      %v741 = vadd.f32 %v739, %v740
      %742 = vadd.xlane.f32.xlu0 %v741
      %v743 = vpop.xlane.xlu0 %742
      %v744 = vrcp.pop 512.0
      %v745 = vmul.f32 %v743, %v744
      %v746 = vsub.f32 %v659, %v745
      %v747 = vsub.f32 %v661, %v745
      %v748 = vsub.f32 %v730, %v745
      %v749 = vsub.f32 %v732, %v745
      %v750 = vmul.f32 %v746, %v746
      %v751 = vmul.f32 %v747, %v747
      %v752 = vmul.f32 %v748, %v748
      %v753 = vmul.f32 %v749, %v749
      %v754 = vsel %vm734, %v750, 0.0
      %v755 = vsel %vm734, %v751, 0.0
      %v756 = vadd.f32 %v754, %v755
      %v757 = vsel %vm734, %v752, 0.0
      %v758 = vadd.f32 %v756, %v757
      %v759 = vsel %vm734, %v753, 0.0
      %v760 = vadd.f32 %v758, %v759
      %761 = vadd.xlane.f32.xlu0 %v760
      %v762 = vpop.xlane.xlu0 %761
      %v763 = vmul.f32 %v762, %v744
      %v764 = vadd.f32 %v763, 1e-05
      %v765 = vrsqrt.pop %v764
      %v766 = vld [vmem:[%s474] sm:$0xf]
      %v767 = vmul.f32 %v765, %v766
      %769 = vset.pattern.permute.xlu0 0
      %770 = vperm.xlu0 %769, %v767
      %v771 = vpop.permute.xlu0 %770
      %v773 = vmul.f32 %v746, %v771
      %v774 = vmul.f32 %v747, %v771
      %v775 = vmul.f32 %v748, %v771
      %v776 = vmul.f32 %v749, %v771
      %v777 = vld [vmem:[%s478] sm:$0xf]
      %779 = vset.pattern.permute.xlu0 0
      %780 = vperm.xlu0 %779, %v777
      %v781 = vpop.permute.xlu0 %780
      %v783 = vadd.f32 %v773, %v781
      %v784 = vadd.f32 %v774, %v781
      %v785 = vadd.f32 %v775, %v781
      %v786 = vadd.f32 %v776, %v781
      %v787 = vmax.f32 %v783, 0.0
      %v788 = vmax.f32 %v784, 0.0
      %v789 = vmax.f32 %v785, 0.0
      %v790 = vmax.f32 %v786, 0.0
      %v791 = vld [vmem:[%s483] sm:$0xff]
      %v792 = vld [vmem:[%s483 + $0x8] sm:$0xff]
      %v793 = vld [vmem:[%s488] sm:$0xff]
      %v794 = vld [vmem:[%s488 + $0x8] sm:$0xff]
      %796 = vset.pattern.permute.xlu0 0
      %797 = vperm.xlu0 %796, %v793
      %v798 = vpop.permute.xlu0 %797
      %801 = vset.pattern.permute.xlu0 0
      %802 = vperm.xlu0 %801, %v794
      %v803 = vpop.permute.xlu0 %802
      %vm805 = vcmask 31744
      %v807 = vsel %vm805, %v791, 0
      %v810 = vsel %vm805, %v792, 0
      %v813 = vsel %vm734, %v787, 0
      %v816 = vsel %vm734, %v788, 0
      %v819 = vsel %vm734, %v789, 0
      %v822 = vsel %vm734, %v790, 0
      %824 = vmatprep.subr.mxu0 0.0
      %825 = vmatpush1.msra.mxu0 0.0
      %826 = vmatprep.subr.mxu0 0.0
      %827 = vmatpush1.msra.mxu0 0.0
      %828 = vmatprep.subr.mxu0 0.0
      %829 = vmatpush1.msra.mxu0 0.0
      %830 = vmatprep.subr.mxu0 0.0
      %831 = vmatpush1.msra.mxu0 0.0
      %832 = vmatprep.subr.mxu0 0.0
      %833 = vmatpush1.msra.mxu0 0.0
      %834 = vmatprep.subr.mxu0 0.0
      %835 = vmatpush1.msra.mxu0 0.0
      %836 = vmatprep.subr.mxu0 0.0
      %837 = vmatpush1.msra.mxu0 0.0
      %838 = vmatprep.subr.mxu0 0.0
      %839 = vmatpush1.msra.mxu0 0.0
      %840 = vmatprep.subr.mxu0 0.0
      %841 = vmatpush1.msra.mxu0 0.0
      %842 = vmatprep.subr.mxu0 0.0
      %843 = vmatpush1.msra.mxu0 0.0
      %844 = vmatprep.subr.mxu0 0.0
      %845 = vmatpush1.msra.mxu0 0.0
      %846 = vmatprep.subr.mxu0 0.0
      %847 = vmatpush1.msra.mxu0 0.0
      %848 = vmatprep.subr.mxu0 0.0
      %849 = vmatpush1.msra.mxu0 0.0
      %850 = vmatprep.subr.mxu0 0.0
      %851 = vmatpush1.msra.mxu0 0.0
      %852 = vmatprep.subr.mxu0 0.0
      %853 = vmatpush1.msra.mxu0 0.0
      %854 = vmatprep.subr.mxu0 %v816
      %855 = vmatpush1.msra.mxu0 %v813
      %856 = vmatprep.subr.mxu0 0.0
      %857 = vmatpush2.msra.mxu0 0.0
      %858 = vmatprep.subr.mxu0 0.0
      %859 = vmatpush2.msra.mxu0 0.0
      %860 = vmatprep.subr.mxu0 0.0
      %861 = vmatpush2.msra.mxu0 0.0
      %862 = vmatprep.subr.mxu0 0.0
      %863 = vmatpush2.msra.mxu0 0.0
      %864 = vmatprep.subr.mxu0 0.0
      %865 = vmatpush2.msra.mxu0 0.0
      %866 = vmatprep.subr.mxu0 0.0
      %867 = vmatpush2.msra.mxu0 0.0
      %868 = vmatprep.subr.mxu0 0.0
      %869 = vmatpush2.msra.mxu0 0.0
      %870 = vmatprep.subr.mxu0 0.0
      %871 = vmatpush2.msra.mxu0 0.0
      %872 = vmatprep.subr.mxu0 0.0
      %873 = vmatpush2.msra.mxu0 0.0
      %874 = vmatprep.subr.mxu0 0.0
      %875 = vmatpush2.msra.mxu0 0.0
      %876 = vmatprep.subr.mxu0 0.0
      %877 = vmatpush2.msra.mxu0 0.0
      %878 = vmatprep.subr.mxu0 0.0
      %879 = vmatpush2.msra.mxu0 0.0
      %880 = vmatprep.subr.mxu0 0.0
      %881 = vmatpush2.msra.mxu0 0.0
      %882 = vmatprep.subr.mxu0 0.0
      %883 = vmatpush2.msra.mxu0 0.0
      %884 = vmatprep.subr.mxu0 0.0
      %885 = vmatpush2.msra.mxu0 0.0
      %886 = vmatprep.subr.mxu0 0.0
      %887 = vmatpush2.msra.mxu0 0.0
      %888 = vmatprep.mubr.f32.mxu0 0.0
      %889 = vmatmul.mubr.f32.gmra.mxu0 %v807
      %v890 = vpop.f32.mrf.mxu0
      %v891 = vadd.f32 %v798, %v890
      %v892 = vpop.f32.mrf.mxu0
      %v893 = vadd.f32 %v798, %v892
      %894 = vmatprep.mubr.f32.mxu0 0.0
      %895 = vmatmul.mubr.f32.gmra.mxu0 %v810
      %v896 = vpop.f32.mrf.mxu0
      %v897 = vadd.f32 %v803, %v896
      %v898 = vpop.f32.mrf.mxu0
      %v899 = vadd.f32 %v803, %v898
      %900 = vdwg.mxu0
      %901 = vmatprep.subr.mxu0 0.0
      %902 = vmatpush1.msra.mxu0 0.0
      %903 = vmatprep.subr.mxu0 0.0
      %904 = vmatpush1.msra.mxu0 0.0
      %905 = vmatprep.subr.mxu0 0.0
      %906 = vmatpush1.msra.mxu0 0.0
      %907 = vmatprep.subr.mxu0 0.0
      %908 = vmatpush1.msra.mxu0 0.0
      %909 = vmatprep.subr.mxu0 0.0
      %910 = vmatpush1.msra.mxu0 0.0
      %911 = vmatprep.subr.mxu0 0.0
      %912 = vmatpush1.msra.mxu0 0.0
      %913 = vmatprep.subr.mxu0 0.0
      %914 = vmatpush1.msra.mxu0 0.0
      %915 = vmatprep.subr.mxu0 0.0
      %916 = vmatpush1.msra.mxu0 0.0
      %917 = vmatprep.subr.mxu0 0.0
      %918 = vmatpush1.msra.mxu0 0.0
      %919 = vmatprep.subr.mxu0 0.0
      %920 = vmatpush1.msra.mxu0 0.0
      %921 = vmatprep.subr.mxu0 0.0
      %922 = vmatpush1.msra.mxu0 0.0
      %923 = vmatprep.subr.mxu0 0.0
      %924 = vmatpush1.msra.mxu0 0.0
      %925 = vmatprep.subr.mxu0 0.0
      %926 = vmatpush1.msra.mxu0 0.0
      %927 = vmatprep.subr.mxu0 0.0
      %928 = vmatpush1.msra.mxu0 0.0
      %929 = vmatprep.subr.mxu0 0.0
      %930 = vmatpush1.msra.mxu0 0.0
      %931 = vmatprep.subr.mxu0 %v822
      %932 = vmatpush1.msra.mxu0 %v819
      %933 = vmatprep.subr.mxu0 0.0
      %934 = vmatpush2.msra.mxu0 0.0
      %935 = vmatprep.subr.mxu0 0.0
      %936 = vmatpush2.msra.mxu0 0.0
      %937 = vmatprep.subr.mxu0 0.0
      %938 = vmatpush2.msra.mxu0 0.0
      %939 = vmatprep.subr.mxu0 0.0
      %940 = vmatpush2.msra.mxu0 0.0
      %941 = vmatprep.subr.mxu0 0.0
      %942 = vmatpush2.msra.mxu0 0.0
      %943 = vmatprep.subr.mxu0 0.0
      %944 = vmatpush2.msra.mxu0 0.0
      %945 = vmatprep.subr.mxu0 0.0
      %946 = vmatpush2.msra.mxu0 0.0
      %947 = vmatprep.subr.mxu0 0.0
      %948 = vmatpush2.msra.mxu0 0.0
      %949 = vmatprep.subr.mxu0 0.0
      %950 = vmatpush2.msra.mxu0 0.0
      %951 = vmatprep.subr.mxu0 0.0
      %952 = vmatpush2.msra.mxu0 0.0
      %953 = vmatprep.subr.mxu0 0.0
      %954 = vmatpush2.msra.mxu0 0.0
      %955 = vmatprep.subr.mxu0 0.0
      %956 = vmatpush2.msra.mxu0 0.0
      %957 = vmatprep.subr.mxu0 0.0
      %958 = vmatpush2.msra.mxu0 0.0
      %959 = vmatprep.subr.mxu0 0.0
      %960 = vmatpush2.msra.mxu0 0.0
      %961 = vmatprep.subr.mxu0 0.0
      %962 = vmatpush2.msra.mxu0 0.0
      %963 = vmatprep.subr.mxu0 0.0
      %964 = vmatpush2.msra.mxu0 0.0
      %965 = vmatprep.mubr.f32.mxu0 0.0
      %966 = vmatmul.mubr.f32.gmra.mxu0 %v807
      %v967 = vpop.f32.mrf.mxu0
      %v968 = vadd.f32 %v798, %v967
      %v969 = vpop.f32.mrf.mxu0
      %v970 = vadd.f32 %v798, %v969
      %971 = vmatprep.mubr.f32.mxu0 0.0
      %972 = vmatmul.mubr.f32.gmra.mxu0 %v810
      %v973 = vpop.f32.mrf.mxu0
      %v974 = vadd.f32 %v803, %v973
      %v975 = vpop.f32.mrf.mxu0
      %v976 = vadd.f32 %v803, %v975
      %977 = vdwg.mxu0
      %v978 = vadd.f32 %v891, %v893
      %v979 = vadd.f32 %v978, %v968
      %v980 = vadd.f32 %v979, %v970
      %981 = vadd.xlane.f32.xlu0 %v980
      %v982 = vpop.xlane.xlu0 %981
      %v983 = vadd.f32 %v897, %v899
      %v984 = vadd.f32 %v983, %v974
      %v985 = vadd.f32 %v984, %v976
      %986 = vadd.xlane.f32.xlu0 %v985
      %v987 = vpop.xlane.xlu0 %986
      %v988 = vmul.f32 %v982, %v744
      %v989 = vmul.f32 %v987, %v744
      %v991 = vrot.slane %v988, 4
      %v993 = vadd.f32 %v988, %v991
      %v994 = vadd.f32 %v993, %v989
      %v996 = vrot.slane %v989, 4
      %v998 = vadd.f32 %v994, %v996
      %v999 = vmul.f32 %v998, 0.25
      %v1001 = vrot.slane %v999, 4
      %v1003 = vsel %vm734, %v999, %v1001
      %1005 = vset.pattern.permute.xlu0 0
      %1006 = vperm.xlu0 %1005, %v1003
      %v1007 = vpop.permute.xlu0 %1006
      %v1009 = vsub.f32 %v891, %v1007
      %v1010 = vsub.f32 %v893, %v1007
      %v1011 = vsub.f32 %v968, %v1007
      %v1012 = vsub.f32 %v970, %v1007
      %v1013 = vsub.f32 %v897, %v1007
      %v1014 = vsub.f32 %v899, %v1007
      %v1015 = vsub.f32 %v974, %v1007
      %v1016 = vsub.f32 %v976, %v1007
      %v1017 = vmul.f32 %v1009, %v1009
      %v1018 = vmul.f32 %v1010, %v1010
      %v1019 = vmul.f32 %v1011, %v1011
      %v1020 = vmul.f32 %v1012, %v1012
      %v1021 = vmul.f32 %v1013, %v1013
      %v1022 = vmul.f32 %v1014, %v1014
      %v1023 = vmul.f32 %v1015, %v1015
      %v1024 = vmul.f32 %v1016, %v1016
      %v1025 = vadd.f32 %v1017, %v1018
      %v1026 = vadd.f32 %v1025, %v1019
      %v1027 = vadd.f32 %v1026, %v1020
      %1028 = vadd.xlane.f32.xlu0 %v1027
      %v1029 = vpop.xlane.xlu0 %1028
      %v1030 = vadd.f32 %v1021, %v1022
      %v1031 = vadd.f32 %v1030, %v1023
      %v1032 = vadd.f32 %v1031, %v1024
      %1033 = vadd.xlane.f32.xlu0 %v1032
      %v1034 = vpop.xlane.xlu0 %1033
      %v1035 = vmul.f32 %v1029, %v744
      %v1036 = vmul.f32 %v1034, %v744
      %v1038 = vrot.slane %v1035, 4
      %v1040 = vadd.f32 %v1035, %v1038
      %v1041 = vadd.f32 %v1040, %v1036
      %v1043 = vrot.slane %v1036, 4
      %v1045 = vadd.f32 %v1041, %v1043
      %v1046 = vmul.f32 %v1045, 0.25
      %v1047 = vadd.f32 %v1046, 1e-05
      %v1048 = vrsqrt.pop %v1047
      %v1050 = vrot.slane %v1048, 4
      %v1052 = vsel %vm734, %v1048, %v1050
      %v1053 = vld [vmem:[%s493] sm:$0xff]
      %v1054 = vld [vmem:[%s493 + $0x8] sm:$0xff]
      %v1055 = vmul.f32 %v1052, %v1053
      %v1056 = vmul.f32 %v1052, %v1054
      %1058 = vset.pattern.permute.xlu0 0
      %1059 = vperm.xlu0 %1058, %v1055
      %v1060 = vpop.permute.xlu0 %1059
      %1063 = vset.pattern.permute.xlu0 0
      %1064 = vperm.xlu0 %1063, %v1056
      %v1065 = vpop.permute.xlu0 %1064
      %v1067 = vmul.f32 %v1009, %v1060
      %v1068 = vmul.f32 %v1010, %v1060
      %v1069 = vmul.f32 %v1011, %v1060
      %v1070 = vmul.f32 %v1012, %v1060
      %v1071 = vmul.f32 %v1013, %v1065
      %v1072 = vmul.f32 %v1014, %v1065
      %v1073 = vmul.f32 %v1015, %v1065
      %v1074 = vmul.f32 %v1016, %v1065
      %v1075 = vld [vmem:[%s498] sm:$0xff]
      %v1076 = vld [vmem:[%s498 + $0x8] sm:$0xff]
      %1078 = vset.pattern.permute.xlu0 0
      %1079 = vperm.xlu0 %1078, %v1075
      %v1080 = vpop.permute.xlu0 %1079
      %1083 = vset.pattern.permute.xlu0 0
      %1084 = vperm.xlu0 %1083, %v1076
      %v1085 = vpop.permute.xlu0 %1084
      %v1087 = vadd.f32 %v1067, %v1080
      %v1088 = vadd.f32 %v1068, %v1080
      %v1089 = vadd.f32 %v1069, %v1080
      %v1090 = vadd.f32 %v1070, %v1080
      %v1091 = vadd.f32 %v1071, %v1085
      %v1092 = vadd.f32 %v1072, %v1085
      %v1093 = vadd.f32 %v1073, %v1085
      %v1094 = vadd.f32 %v1074, %v1085
      %v1095 = vmax.f32 %v1087, 0.0
      %v1096 = vmax.f32 %v1088, 0.0
      %v1097 = vmax.f32 %v1089, 0.0
      %v1098 = vmax.f32 %v1090, 0.0
      %v1099 = vmax.f32 %v1091, 0.0
      %v1100 = vmax.f32 %v1092, 0.0
      %v1101 = vmax.f32 %v1093, 0.0
      %v1102 = vmax.f32 %v1094, 0.0
      %v1103 = vld [vmem:[%s503] sm:$0xff]
      %v1104 = vld [vmem:[%s503 + $0x8] sm:$0xff]
      %v1105 = vld [vmem:[%s508] sm:$0xff]
      %v1106 = vld [vmem:[%s508 + $0x8] sm:$0xff]
      %1108 = vset.pattern.permute.xlu0 0
      %1109 = vperm.xlu0 %1108, %v1105
      %v1110 = vpop.permute.xlu0 %1109
      %1113 = vset.pattern.permute.xlu0 0
      %1114 = vperm.xlu0 %1113, %v1106
      %v1115 = vpop.permute.xlu0 %1114
      %v1118 = vsel %vm589, %v1103, 0
      %v1121 = vsel %vm589, %v1104, 0
      %1123 = vmatprep.subr.mxu0 0.0
      %1124 = vmatpush1.msra.mxu0 0.0
      %1125 = vmatprep.subr.mxu0 0.0
      %1126 = vmatpush1.msra.mxu0 0.0
      %1127 = vmatprep.subr.mxu0 0.0
      %1128 = vmatpush1.msra.mxu0 0.0
      %1129 = vmatprep.subr.mxu0 0.0
      %1130 = vmatpush1.msra.mxu0 0.0
      %1131 = vmatprep.subr.mxu0 0.0
      %1132 = vmatpush1.msra.mxu0 0.0
      %1133 = vmatprep.subr.mxu0 0.0
      %1134 = vmatpush1.msra.mxu0 0.0
      %1135 = vmatprep.subr.mxu0 0.0
      %1136 = vmatpush1.msra.mxu0 0.0
      %1137 = vmatprep.subr.mxu0 0.0
      %1138 = vmatpush1.msra.mxu0 0.0
      %1139 = vmatprep.subr.mxu0 0.0
      %1140 = vmatpush1.msra.mxu0 0.0
      %1141 = vmatprep.subr.mxu0 0.0
      %1142 = vmatpush1.msra.mxu0 0.0
      %1143 = vmatprep.subr.mxu0 0.0
      %1144 = vmatpush1.msra.mxu0 0.0
      %1145 = vmatprep.subr.mxu0 0.0
      %1146 = vmatpush1.msra.mxu0 0.0
      %1147 = vmatprep.subr.mxu0 0.0
      %1148 = vmatpush1.msra.mxu0 0.0
      %1149 = vmatprep.subr.mxu0 0.0
      %1150 = vmatpush1.msra.mxu0 0.0
      %1151 = vmatprep.subr.mxu0 %v1100
      %1152 = vmatpush1.msra.mxu0 %v1099
      %1153 = vmatprep.subr.mxu0 %v1096
      %1154 = vmatpush1.msra.mxu0 %v1095
      %1155 = vmatprep.subr.mxu0 0.0
      %1156 = vmatpush2.msra.mxu0 0.0
      %1157 = vmatprep.subr.mxu0 0.0
      %1158 = vmatpush2.msra.mxu0 0.0
      %1159 = vmatprep.subr.mxu0 0.0
      %1160 = vmatpush2.msra.mxu0 0.0
      %1161 = vmatprep.subr.mxu0 0.0
      %1162 = vmatpush2.msra.mxu0 0.0
      %1163 = vmatprep.subr.mxu0 0.0
      %1164 = vmatpush2.msra.mxu0 0.0
      %1165 = vmatprep.subr.mxu0 0.0
      %1166 = vmatpush2.msra.mxu0 0.0
      %1167 = vmatprep.subr.mxu0 0.0
      %1168 = vmatpush2.msra.mxu0 0.0
      %1169 = vmatprep.subr.mxu0 0.0
      %1170 = vmatpush2.msra.mxu0 0.0
      %1171 = vmatprep.subr.mxu0 0.0
      %1172 = vmatpush2.msra.mxu0 0.0
      %1173 = vmatprep.subr.mxu0 0.0
      %1174 = vmatpush2.msra.mxu0 0.0
      %1175 = vmatprep.subr.mxu0 0.0
      %1176 = vmatpush2.msra.mxu0 0.0
      %1177 = vmatprep.subr.mxu0 0.0
      %1178 = vmatpush2.msra.mxu0 0.0
      %1179 = vmatprep.subr.mxu0 0.0
      %1180 = vmatpush2.msra.mxu0 0.0
      %1181 = vmatprep.subr.mxu0 0.0
      %1182 = vmatpush2.msra.mxu0 0.0
      %1183 = vmatprep.subr.mxu0 0.0
      %1184 = vmatpush2.msra.mxu0 0.0
      %1185 = vmatprep.subr.mxu0 0.0
      %1186 = vmatpush2.msra.mxu0 0.0
      %1187 = vmatprep.mubr.f32.mxu0 0.0
      %1188 = vmatmul.mubr.f32.gmra.mxu0 %v1118
      %v1189 = vpop.f32.mrf.mxu0
      %v1190 = vadd.f32 %v1110, %v1189
      %v1191 = vpop.f32.mrf.mxu0
      %v1192 = vadd.f32 %v1110, %v1191
      %1193 = vmatprep.mubr.f32.mxu0 0.0
      %1194 = vmatmul.mubr.f32.gmra.mxu0 %v1121
      %v1195 = vpop.f32.mrf.mxu0
      %v1196 = vadd.f32 %v1115, %v1195
      %v1197 = vpop.f32.mrf.mxu0
      %v1198 = vadd.f32 %v1115, %v1197
      %1199 = vdwg.mxu0
      %1200 = vmatprep.subr.mxu0 0.0
      %1201 = vmatpush1.msra.mxu0 0.0
      %1202 = vmatprep.subr.mxu0 0.0
      %1203 = vmatpush1.msra.mxu0 0.0
      %1204 = vmatprep.subr.mxu0 0.0
      %1205 = vmatpush1.msra.mxu0 0.0
      %1206 = vmatprep.subr.mxu0 0.0
      %1207 = vmatpush1.msra.mxu0 0.0
      %1208 = vmatprep.subr.mxu0 0.0
      %1209 = vmatpush1.msra.mxu0 0.0
      %1210 = vmatprep.subr.mxu0 0.0
      %1211 = vmatpush1.msra.mxu0 0.0
      %1212 = vmatprep.subr.mxu0 0.0
      %1213 = vmatpush1.msra.mxu0 0.0
      %1214 = vmatprep.subr.mxu0 0.0
      %1215 = vmatpush1.msra.mxu0 0.0
      %1216 = vmatprep.subr.mxu0 0.0
      %1217 = vmatpush1.msra.mxu0 0.0
      %1218 = vmatprep.subr.mxu0 0.0
      %1219 = vmatpush1.msra.mxu0 0.0
      %1220 = vmatprep.subr.mxu0 0.0
      %1221 = vmatpush1.msra.mxu0 0.0
      %1222 = vmatprep.subr.mxu0 0.0
      %1223 = vmatpush1.msra.mxu0 0.0
      %1224 = vmatprep.subr.mxu0 0.0
      %1225 = vmatpush1.msra.mxu0 0.0
      %1226 = vmatprep.subr.mxu0 0.0
      %1227 = vmatpush1.msra.mxu0 0.0
      %1228 = vmatprep.subr.mxu0 %v1102
      %1229 = vmatpush1.msra.mxu0 %v1101
      %1230 = vmatprep.subr.mxu0 %v1098
      %1231 = vmatpush1.msra.mxu0 %v1097
      %1232 = vmatprep.subr.mxu0 0.0
      %1233 = vmatpush2.msra.mxu0 0.0
      %1234 = vmatprep.subr.mxu0 0.0
      %1235 = vmatpush2.msra.mxu0 0.0
      %1236 = vmatprep.subr.mxu0 0.0
      %1237 = vmatpush2.msra.mxu0 0.0
      %1238 = vmatprep.subr.mxu0 0.0
      %1239 = vmatpush2.msra.mxu0 0.0
      %1240 = vmatprep.subr.mxu0 0.0
      %1241 = vmatpush2.msra.mxu0 0.0
      %1242 = vmatprep.subr.mxu0 0.0
      %1243 = vmatpush2.msra.mxu0 0.0
      %1244 = vmatprep.subr.mxu0 0.0
      %1245 = vmatpush2.msra.mxu0 0.0
      %1246 = vmatprep.subr.mxu0 0.0
      %1247 = vmatpush2.msra.mxu0 0.0
      %1248 = vmatprep.subr.mxu0 0.0
      %1249 = vmatpush2.msra.mxu0 0.0
      %1250 = vmatprep.subr.mxu0 0.0
      %1251 = vmatpush2.msra.mxu0 0.0
      %1252 = vmatprep.subr.mxu0 0.0
      %1253 = vmatpush2.msra.mxu0 0.0
      %1254 = vmatprep.subr.mxu0 0.0
      %1255 = vmatpush2.msra.mxu0 0.0
      %1256 = vmatprep.subr.mxu0 0.0
      %1257 = vmatpush2.msra.mxu0 0.0
      %1258 = vmatprep.subr.mxu0 0.0
      %1259 = vmatpush2.msra.mxu0 0.0
      %1260 = vmatprep.subr.mxu0 0.0
      %1261 = vmatpush2.msra.mxu0 0.0
      %1262 = vmatprep.subr.mxu0 0.0
      %1263 = vmatpush2.msra.mxu0 0.0
      %1264 = vmatprep.mubr.f32.mxu0 0.0
      %1265 = vmatmul.mubr.f32.gmra.mxu0 %v1118
      %v1266 = vpop.f32.mrf.mxu0
      %v1267 = vadd.f32 %v1110, %v1266
      %v1268 = vpop.f32.mrf.mxu0
      %v1269 = vadd.f32 %v1110, %v1268
      %1270 = vmatprep.mubr.f32.mxu0 0.0
      %1271 = vmatmul.mubr.f32.gmra.mxu0 %v1121
      %v1272 = vpop.f32.mrf.mxu0
      %v1273 = vadd.f32 %v1115, %v1272
      %v1274 = vpop.f32.mrf.mxu0
      %v1275 = vadd.f32 %v1115, %v1274
      %1276 = vdwg.mxu0
      %v1277 = vsub.f32 0.0, %v1190
      %v1278 = vsub.f32 0.0, %v1192
      %v1279 = vsub.f32 0.0, %v1267
      %v1280 = vsub.f32 0.0, %v1269
      %v1281 = vsub.f32 0.0, %v1196
      %v1282 = vsub.f32 0.0, %v1198
      %v1283 = vsub.f32 0.0, %v1273
      %v1284 = vsub.f32 0.0, %v1275
      %v1285 = vmul.f32 %v1277, 1.442695
      %v1286 = vpow.pop %v1285
      %v1287 = vmul.f32 %v1278, 1.442695
      %v1288 = vpow.pop %v1287
      %v1289 = vmul.f32 %v1279, 1.442695
      %v1290 = vpow.pop %v1289
      %v1291 = vmul.f32 %v1280, 1.442695
      %v1292 = vpow.pop %v1291
      %v1293 = vmul.f32 %v1281, 1.442695
      %v1294 = vpow.pop %v1293
      %v1295 = vmul.f32 %v1282, 1.442695
      %v1296 = vpow.pop %v1295
      %v1297 = vmul.f32 %v1283, 1.442695
      %v1298 = vpow.pop %v1297
      %v1299 = vmul.f32 %v1284, 1.442695
      %v1300 = vpow.pop %v1299
      %v1301 = vadd.f32 %v1286, 1.0
      %v1302 = vadd.f32 %v1288, 1.0
      %v1303 = vadd.f32 %v1290, 1.0
      %v1304 = vadd.f32 %v1292, 1.0
      %v1305 = vadd.f32 %v1294, 1.0
      %v1306 = vadd.f32 %v1296, 1.0
      %v1307 = vadd.f32 %v1298, 1.0
      %v1308 = vadd.f32 %v1300, 1.0
      %v1309 = vrcp.pop %v1301
      %v1310 = vmul.f32 1.0, %v1309
      %v1311 = vrcp.pop %v1302
      %v1312 = vmul.f32 1.0, %v1311
      %v1313 = vrcp.pop %v1303
      %v1314 = vmul.f32 1.0, %v1313
      %v1315 = vrcp.pop %v1304
      %v1316 = vmul.f32 1.0, %v1315
      %v1317 = vrcp.pop %v1305
      %v1318 = vmul.f32 1.0, %v1317
      %v1319 = vrcp.pop %v1306
      %v1320 = vmul.f32 1.0, %v1319
      %v1321 = vrcp.pop %v1307
      %v1322 = vmul.f32 1.0, %v1321
      %v1323 = vrcp.pop %v1308
      %v1324 = vmul.f32 1.0, %v1323
      %1325 = vst [vmem:[%s513] sm:$0xff] %v1310
      %1326 = vst [vmem:[%s513 + $0x8] sm:$0xff] %v1312
      %1327 = vst [vmem:[%s513 + $0x10] sm:$0xff] %v1314
      %1328 = vst [vmem:[%s513 + $0x18] sm:$0xff] %v1316
      %1329 = vst [vmem:[%s513 + $0x20] sm:$0xff] %v1318
      %1330 = vst [vmem:[%s513 + $0x28] sm:$0xff] %v1320
      %1331 = vst [vmem:[%s513 + $0x30] sm:$0xff] %v1322
      %1332 = vst [vmem:[%s513 + $0x38] sm:$0xff] %v1324
      %p1333 = scmp.lt.s32.totalorder %s21, 1
      %s1334 = scalar_select %p1333, %s21, 1
      %s1335 = smul.addr %s1334, 8
      %s1336 = smul.addr %s1335, 8
      %s1337 = scalar_lea.vmem %s10, %s1336
      // Predicated region
      $region61: #{dbhead_forward.2} parent=59 // pred_check
        %p1338 = pneg %p294
      $region62: #{dbhead_forward.2} parent=59 // pred_check_branch
        %1340 = sbr.rel (%p1338) target = $region64
      $region63: #{dbhead_forward.2} parent=59 // pred_region
        _
      $region64: #{dbhead_forward.2} parent=59 // pred_fallthru
        _
    $region60: #{dbhead_forward.2} parent=5 // pred_fallthru
      _
    %p1341 = scmp.le.s32.totalorder 2, %s16
    // Predicated region
    $region65: #{dbhead_forward.2} parent=5 // pred_check
      %p1342 = pneg %p1341
    $region66: #{dbhead_forward.2} parent=5 // pred_check_branch
      %1344 = sbr.rel (%p1342) target = $region68
    $region67: #{dbhead_forward.2} parent=5 // pred_region
      %s1345 = ssub.s32 %s16, 2
      // Predicated region
      $region69: #{dbhead_forward.2} parent=67 // pred_check
        %p1346 = pneg %p300
      $region70: #{dbhead_forward.2} parent=67 // pred_check_branch
        %1348 = sbr.rel (%p1346) target = $region72
      $region71: #{dbhead_forward.2} parent=67 // pred_region
        %p1349 = scmp.lt.s32.totalorder %s22, 1
        %s1350 = scalar_select %p1349, %s22, 1
        %s1351 = smul.addr %s1350, 8
        %s1352 = smul.addr %s1351, 8
        %s1353 = scalar_lea.vmem %s10, %s1352
      $region72: #{dbhead_forward.2} parent=67 // pred_fallthru
        _
    $region68: #{dbhead_forward.2} parent=5 // pred_fallthru
      _
  $region6: #{dbhead_forward.2} parent=0 // loop_footer
    %s20 = sadd.s32 1, %s16
  $region7: #{dbhead_forward.2} parent=0 // loop_footer_branch
    %15 = sbr.rel target = $region3
  $region8: #{dbhead_forward.2} parent=0 // loop_exit
    _

</llo_original>
